<compile_context>
chip_gen: v7x
topology: tpu7x:2x2x1
jax: 0.10.0
libtpu: 0.0.40
codegen_flags: <defaults>
</compile_context>

<pallas_src>
import math

import numpy as np
import jax
import jax.numpy as jnp
from jax.experimental import pallas as pl
from jax.experimental.pallas import tpu as pltpu

LEAKY_ALPHA = 0.2            # LeakyReLU negative slope ("alpha" in the module)
NEG_BIG = -9.0e15            # the -9000000000000000.0 mask value
LANE = 128                   # TPU lane width
HIGHEST = jax.lax.Precision.HIGHEST   # accurate f32 matmuls (parity with torch f32)


def _round_up(v, m):
    return ((v + m - 1) // m) * m


def gat_kernel(x_ref, adj_ref, wbig_ref, bgc_ref, out_ref):
    """One graph per grid step.

    Per-step ref shapes:
      x: (N, Fin), adj: (N, N), wbig: (Fin, 2*Fpad + 128), bgc: (1, Fpad),
      out: (N, Fpad) with Fpad = round_up(Fout, 128) (lane-dense store).
    """
    fpad = out_ref.shape[-1]

    x = x_ref[...]                                   # (N, Fin)
    adj = adj_ref[...]                               # (N, N)

    # Single fused projection (one MXU push):
    #   y = x @ [ W|0  ||  W_gc|0  ||  W@a1, W@a2, 0... ]
    y = jnp.dot(x, wbig_ref[...], precision=HIGHEST,
                preferred_element_type=jnp.float32)  # (N, 2*Fpad + 128)
    h = y[:, :fpad]                                  # (N, Fpad) = x @ W   (pad lanes 0)
    gc = y[:, fpad:2 * fpad]                         # (N, Fpad) = x @ W_gc
    f1 = y[:, 2 * fpad:2 * fpad + 1]                 # (N, 1)    = (x @ W) @ a[:F]
    f2 = y[:, 2 * fpad + 1:2 * fpad + 2]             # (N, 1)    = (x @ W) @ a[F:]

    # e[i, j] = leaky_relu(f1[i] + f2[j]); the (N,1)->(1,N) move rides the XLU
    # slot instead of a serialized skinny MXU dot.
    e = f1 + jnp.transpose(f2)                       # (N, N)
    e = jnp.where(e > 0.0, e, LEAKY_ALPHA * e)       # LeakyReLU (VPU)
    e = jnp.where(adj > 0.0, e, NEG_BIG)             # adjacency mask

    # Row softmax. Exact f32 divide for parity with the PyTorch module — the
    # kernel is overhead-bound at this size, so the EUP approx reciprocal buys
    # nothing and only costs accuracy.
    e = e - jnp.max(e, axis=1, keepdims=True)
    p = jnp.exp(e)                                   # (EUP)
    attn = p / jnp.sum(p, axis=1, keepdims=True)
    # TODO(synk): training-mode dropout on `attn` would go here (eval: identity).

    # Two accumulating MXU pushes into one f32 result (no concat relayouts):
    out = jnp.dot(attn, h, precision=HIGHEST, preferred_element_type=jnp.float32)
    out = out + jnp.dot(adj, gc, precision=HIGHEST,
                        preferred_element_type=jnp.float32)
    out_ref[...] = out + bgc_ref[...]                # + b_gc (broadcast row)


def gat_forward(x, adj, W, a, W_gc, b_gc):
    """x: (B, N, Fin) or (N, Fin); adj: (B, N, N) or (N, N).

    Returns (B, N, Fout) (or (N, Fout) for unbatched input)."""
    squeeze = x.ndim == 2
    if squeeze:
        x, adj = x[None], adj[None]
    x = x.astype(jnp.float32)
    adj = adj.astype(jnp.float32)

    B, N, Fin = x.shape
    Fout = W.shape[1]
    Fpad = _round_up(Fout, LANE)
    wcols = 2 * Fpad + LANE

    # Host-side weight fusion: W, W_gc and the two attention projections W@a1,
    # W@a2 become one (Fin, 2*Fpad+128) matrix -> a single MXU push in-kernel.
    a1, a2 = a[:Fout], a[Fout:]
    wa1 = jnp.dot(W.astype(jnp.float32), a1.astype(jnp.float32), precision=HIGHEST)
    wa2 = jnp.dot(W.astype(jnp.float32), a2.astype(jnp.float32), precision=HIGHEST)
    wbig = jnp.zeros((Fin, wcols), jnp.float32)
    wbig = wbig.at[:, :Fout].set(W.astype(jnp.float32))
    wbig = wbig.at[:, Fpad:Fpad + Fout].set(W_gc.astype(jnp.float32))
    wbig = wbig.at[:, 2 * Fpad:2 * Fpad + 1].set(wa1)
    wbig = wbig.at[:, 2 * Fpad + 1:2 * Fpad + 2].set(wa2)

    bpad = jnp.zeros((1, Fpad), jnp.float32).at[0, :Fout].set(b_gc.astype(jnp.float32))

    out_pad = pl.pallas_call(
        gat_kernel,
        out_shape=jax.ShapeDtypeStruct((B, N, Fpad), jnp.float32),
        grid=(B,),
        in_specs=[
            pl.BlockSpec((None, N, Fin), lambda b: (b, 0, 0)),   # x (one graph/step)
            pl.BlockSpec((None, N, N), lambda b: (b, 0, 0)),     # adj
            pl.BlockSpec((Fin, wcols), lambda b: (0, 0)),        # fused weights (shared)
            pl.BlockSpec((1, Fpad), lambda b: (0, 0)),           # padded bias (shared)
        ],
        out_specs=pl.BlockSpec((None, N, Fpad), lambda b: (b, 0, 0)),
        compiler_params=pltpu.CompilerParams(
            dimension_semantics=("parallel",)),   # 2 TCs on v7x; harmless on v5e/v6e
    )(x, adj, wbig, bpad)

    out = out_pad[:, :, :Fout]     # strip lane padding (the store itself was lane-dense)
    return out[0] if squeeze else out


def _reference_np(x, adj, W, a, W_gc, b_gc):
    """Float64 NumPy reference with the exact PyTorch-module math (eval mode)."""
    x, adj, W, a, W_gc, b_gc = (np.asarray(v, np.float64)
                                for v in (x, adj, W, a, W_gc, b_gc))
    F = W.shape[1]
    h = x @ W
    e = h @ a[:F] + (h @ a[F:]).T
    e = np.where(e > 0.0, e, LEAKY_ALPHA * e)
    e = np.where(adj > 0.0, e, NEG_BIG)
    e = e - e.max(axis=1, keepdims=True)
    p = np.exp(e)
    attn = p / p.sum(axis=1, keepdims=True)
    return attn @ h + (adj @ (x @ W_gc) + b_gc)


def xavier_uniform(key, shape, gain):
    fan_in, fan_out = shape[0], shape[1]
    bound = gain * math.sqrt(6.0 / (fan_in + fan_out))
    return jax.random.uniform(key, shape, jnp.float32, -bound, bound)


if __name__ == "__main__":
    # module config: in_features=16, out_features=32, dropout=0.0, alpha=0.2,
    # graph_convolve=True; a batch of B=2 graphs with N=8 nodes each.
    B, N, F_IN, F_OUT = 2, 8, 16, 32
    gain = 1.414

    key = jax.random.PRNGKey(0)
    k_x, k_adj, k_w, k_a, k_wgc, k_b = jax.random.split(key, 6)

    x = jax.random.normal(k_x, (B, N, F_IN), jnp.float32)
    # random symmetric 0/1 adjacency with self-loops, per graph
    adj_raw = (jax.random.uniform(k_adj, (B, N, N)) > 0.5).astype(jnp.float32)
    adj = jnp.maximum(adj_raw, jnp.swapaxes(adj_raw, -1, -2))
    adj = jnp.maximum(adj, jnp.eye(N, dtype=jnp.float32))

    W = xavier_uniform(k_w, (F_IN, F_OUT), gain)
    a = xavier_uniform(k_a, (2 * F_OUT, 1), gain)
    W_gc = xavier_uniform(k_wgc, (F_IN, F_OUT), gain)
    b_gc = 0.1 * jax.random.normal(k_b, (F_OUT,), jnp.float32)

    out = jax.block_until_ready(gat_forward(x, adj, W, a, W_gc, b_gc))
    assert out.shape == (B, N, F_OUT)

    # Exact float64 reference; the kernel runs accurate-f32 matmuls and an exact
    # softmax divide, so the expected deviation is ~1e-5 — 5e-3 leaves margin
    # while still catching any real (O(0.1)+) bug.
    ref = np.stack([_reference_np(x[b], adj[b], W, a, W_gc, b_gc)
                    for b in range(B)])
    np.testing.assert_allclose(np.asarray(out), ref, atol=5e-3, rtol=5e-3)

    print("KERNEL_OK")
</pallas_src>

<mosaic_0001>
module attributes {stable_mosaic.version = 11 : i64} {
  func.func @gat_kernel(%arg0: i32, %arg1: memref<1x8x16xf32, #tpu.memory_space<vmem>>, %arg2: memref<1x8x8xf32, #tpu.memory_space<vmem>>, %arg3: memref<16x384xf32, #tpu.memory_space<vmem>>, %arg4: memref<1x128xf32, #tpu.memory_space<vmem>>, %arg5: memref<1x8x128xf32, #tpu.memory_space<vmem>>) attributes {dimension_semantics = [#tpu.dimension_semantics<parallel>], iteration_bounds = array<i64: 2>, scalar_prefetch = 0 : i64, scratch_operands = 0 : i64, tpu.core_type = #tpu.core_type<tc>, window_params = [{transform_indices = @transform_0, window_bounds = array<i64: 1, 8, 16>}, {transform_indices = @transform_1, window_bounds = array<i64: 1, 8, 8>}, {pipeline_mode = #tpu.pipeline_mode<synchronous>, transform_indices = @transform_2, window_bounds = array<i64: 16, 384>}, {pipeline_mode = #tpu.pipeline_mode<synchronous>, transform_indices = @transform_3, window_bounds = array<i64: 1, 128>}, {transform_indices = @transform_4, window_bounds = array<i64: 1, 8, 128>}]} {
    %c0 = arith.constant 0 : index
    %c0_0 = arith.constant 0 : index
    %c0_1 = arith.constant 0 : index
    %0 = vector.load %arg1[%c0, %c0_0, %c0_1] : memref<1x8x16xf32, #tpu.memory_space<vmem>>, vector<1x8x16xf32>
    %1 = vector.shape_cast %0 : vector<1x8x16xf32> to vector<8x16xf32>
    %c0_2 = arith.constant 0 : index
    %c0_3 = arith.constant 0 : index
    %c0_4 = arith.constant 0 : index
    %2 = vector.load %arg2[%c0_2, %c0_3, %c0_4] : memref<1x8x8xf32, #tpu.memory_space<vmem>>, vector<1x8x8xf32>
    %3 = vector.shape_cast %2 : vector<1x8x8xf32> to vector<8x8xf32>
    %c0_5 = arith.constant 0 : index
    %c0_6 = arith.constant 0 : index
    %4 = vector.load %arg3[%c0_5, %c0_6] : memref<16x384xf32, #tpu.memory_space<vmem>>, vector<16x384xf32>
    %cst = arith.constant dense<0.000000e+00> : vector<8x384xf32>
    %5 = tpu.matmul %1, %4, %cst {dimension_numbers = #tpu.dot_dimension_numbers<[1], [0], [0], [1], [0, 0, 1, 1], [], []>, precision = #tpu.contract_precision<fp32>} : vector<8x16xf32>, vector<16x384xf32>, vector<8x384xf32> -> vector<8x384xf32>
    %6 = vector.extract_strided_slice %5 {offsets = [0, 0], sizes = [8, 128], strides = [1, 1]} : vector<8x384xf32> to vector<8x128xf32>
    %7 = vector.extract_strided_slice %5 {offsets = [0, 128], sizes = [8, 128], strides = [1, 1]} : vector<8x384xf32> to vector<8x128xf32>
    %8 = vector.extract_strided_slice %5 {offsets = [0, 256], sizes = [8, 1], strides = [1, 1]} : vector<8x384xf32> to vector<8x1xf32>
    %9 = vector.extract_strided_slice %5 {offsets = [0, 257], sizes = [8, 1], strides = [1, 1]} : vector<8x384xf32> to vector<8x1xf32>
    %10 = tpu.transpose %9, [1, 0] : vector<8x1xf32> -> vector<1x8xf32>
    %11 = vector.broadcast %8 : vector<8x1xf32> to vector<8x8xf32>
    %12 = vector.broadcast %10 : vector<1x8xf32> to vector<8x8xf32>
    %13 = arith.addf %11, %12 : vector<8x8xf32>
    %cst_7 = arith.constant 0.000000e+00 : f32
    %14 = vector.broadcast %cst_7 : f32 to vector<8x8xf32>
    %15 = arith.cmpf ogt, %13, %14 : vector<8x8xf32>
    %cst_8 = arith.constant 2.000000e-01 : f32
    %16 = vector.broadcast %cst_8 : f32 to vector<8x8xf32>
    %17 = arith.mulf %16, %13 : vector<8x8xf32>
    %18 = arith.select %15, %13, %17 : vector<8x8xi1>, vector<8x8xf32>
    %cst_9 = arith.constant 0.000000e+00 : f32
    %19 = vector.broadcast %cst_9 : f32 to vector<8x8xf32>
    %20 = arith.cmpf ogt, %3, %19 : vector<8x8xf32>
    %cst_10 = arith.constant -9.000000e+15 : f32
    %21 = vector.broadcast %cst_10 : f32 to vector<8x8xf32>
    %22 = arith.select %20, %18, %21 : vector<8x8xi1>, vector<8x8xf32>
    %cst_11 = arith.constant dense<0xFF800000> : vector<8xf32>
    %23 = vector.multi_reduction <maximumf>, %22, %cst_11 [1] : vector<8x8xf32> to vector<8xf32>
    %24 = vector.shape_cast %23 : vector<8xf32> to vector<8x1xf32>
    %25 = vector.broadcast %24 : vector<8x1xf32> to vector<8x8xf32>
    %26 = arith.subf %22, %25 : vector<8x8xf32>
    %27 = math.exp %26 : vector<8x8xf32>
    %cst_12 = arith.constant dense<0.000000e+00> : vector<8xf32>
    %28 = vector.multi_reduction <add>, %27, %cst_12 [1] : vector<8x8xf32> to vector<8xf32>
    %29 = vector.shape_cast %28 : vector<8xf32> to vector<8x1xf32>
    %30 = vector.broadcast %29 : vector<8x1xf32> to vector<8x8xf32>
    %31 = arith.divf %27, %30 : vector<8x8xf32>
    %cst_13 = arith.constant dense<0.000000e+00> : vector<8x128xf32>
    %32 = tpu.matmul %31, %6, %cst_13 {dimension_numbers = #tpu.dot_dimension_numbers<[1], [0], [0], [1], [0, 0, 1, 1], [], []>, precision = #tpu.contract_precision<fp32>} : vector<8x8xf32>, vector<8x128xf32>, vector<8x128xf32> -> vector<8x128xf32>
    %cst_14 = arith.constant dense<0.000000e+00> : vector<8x128xf32>
    %33 = tpu.matmul %3, %7, %cst_14 {dimension_numbers = #tpu.dot_dimension_numbers<[1], [0], [0], [1], [0, 0, 1, 1], [], []>, precision = #tpu.contract_precision<fp32>} : vector<8x8xf32>, vector<8x128xf32>, vector<8x128xf32> -> vector<8x128xf32>
    %34 = arith.addf %32, %33 : vector<8x128xf32>
    %c0_15 = arith.constant 0 : index
    %c0_16 = arith.constant 0 : index
    %35 = vector.load %arg4[%c0_15, %c0_16] : memref<1x128xf32, #tpu.memory_space<vmem>>, vector<1x128xf32>
    %36 = vector.broadcast %35 : vector<1x128xf32> to vector<8x128xf32>
    %37 = arith.addf %34, %36 : vector<8x128xf32>
    %c0_17 = arith.constant 0 : index
    %c0_18 = arith.constant 0 : index
    %c0_19 = arith.constant 0 : index
    %38 = vector.load %arg5[%c0_17, %c0_18, %c0_19] : memref<1x8x128xf32, #tpu.memory_space<vmem>>, vector<1x8x128xf32>
    %39 = vector.shape_cast %38 : vector<1x8x128xf32> to vector<8x128xf32>
    %40 = vector.shape_cast %37 : vector<8x128xf32> to vector<1x8x128xf32>
    tpu.vector_store %arg5[%c0_17, %c0_18, %c0_19], %40 {strides = array<i32>} : memref<1x8x128xf32, #tpu.memory_space<vmem>>, vector<1x8x128xf32>,
    return
  }
  func.func @transform_0(%arg0: i32) -> (i32, i32, i32) {
    %c0_i32 = arith.constant 0 : i32
    %c0_i32_0 = arith.constant 0 : i32
    %c0_i32_1 = arith.constant 0 : i32
    return %arg0, %c0_i32, %c0_i32_0 : i32, i32, i32
  }
  func.func @transform_1(%arg0: i32) -> (i32, i32, i32) {
    %c0_i32 = arith.constant 0 : i32
    %c0_i32_0 = arith.constant 0 : i32
    %c0_i32_1 = arith.constant 0 : i32
    return %arg0, %c0_i32, %c0_i32_0 : i32, i32, i32
  }
  func.func @transform_2(%arg0: i32) -> (i32, i32) {
    %c0_i32 = arith.constant 0 : i32
    %c0_i32_0 = arith.constant 0 : i32
    %c0_i32_1 = arith.constant 0 : i32
    return %c0_i32, %c0_i32_0 : i32, i32
  }
  func.func @transform_3(%arg0: i32) -> (i32, i32) {
    %c0_i32 = arith.constant 0 : i32
    %c0_i32_0 = arith.constant 0 : i32
    %c0_i32_1 = arith.constant 0 : i32
    return %c0_i32, %c0_i32_0 : i32, i32
  }
  func.func @transform_4(%arg0: i32) -> (i32, i32, i32) {
    %c0_i32 = arith.constant 0 : i32
    %c0_i32_0 = arith.constant 0 : i32
    %c0_i32_1 = arith.constant 0 : i32
    return %arg0, %c0_i32, %c0_i32_0 : i32, i32, i32
  }
}

</mosaic_0001>

<llo_original>
// kernel: tpu_custom_call.1
$region0: #{tpu_custom_call.1}
  #allocation0 [shape = 'u32[]', space=smem, size = 0x4, offset = 0x4, fixed_abs, tag = 'smem constant byte address 0x4 - core index']
  #allocation1 [shape = 'u32[144,128]{1,0:T(1,128)}', space=vmem, size = 0x12000, scoped, tag = 'internal scratch']
  %s0 = inlined_call_operand.hbm [shape: f32[2,8,16], index: 0, kind: input, shape index: {}]
  %s1 = inlined_call_operand.hbm [shape: f32[2,8,8], index: 1, kind: input, shape index: {}]
  %s2 = inlined_call_operand.hbm [shape: f32[16,384], index: 2, kind: input, shape index: {}]
  %s3 = inlined_call_operand.vmem [shape: f32[1,128], index: 3, kind: input, shape index: {}]
  %s4 = inlined_call_operand.hbm [shape: f32[2,8,128], index: 4, kind: output, shape index: {}]
  %s5 = sld [smem:[#allocation0]]
  $region61: #{tpu_custom_call.1} parent=0
    _
  %s7 = ssub.s32 1, %s5
  %s8 = scalar_select 0, %s7, %s5
  $region1: #{tpu_custom_call.1} parent=0
    #allocation2 [shape = 'u8[8192]{0}', space=vmem, size = 0x2000, scoped, tag = 'input window, operand 0']
    #allocation3 [shape = 's32[2]{0}', space=sflag, size = 0x8, scoped, tag = 'scoped memory for tpu_custom_call.1']
    #allocation4 [shape = 's32[2]{0}', space=sflag, size = 0x8, scoped, tag = 'scoped memory for tpu_custom_call.1']
    #allocation5 [shape = 'u8[8192]{0}', space=vmem, size = 0x2000, scoped, tag = 'input window, operand 1']
    #allocation6 [shape = 's32[2]{0}', space=sflag, size = 0x8, scoped, tag = 'scoped memory for tpu_custom_call.1']
    #allocation7 [shape = 'u8[24576]{0}', space=vmem, size = 0x6000, scoped, tag = 'input window, operand 2, single buffered']
    #allocation8 [shape = 'u8[8192]{0}', space=vmem, size = 0x2000, scoped, tag = 'output window, operand 0']
    %9 = vsyncpa [#allocation3], 0
    %s10 = scalar_lea.sflag [#allocation3], 1
    %11 = vsyncpa %s10, 0
    %12 = vsyncpa [#allocation6], 0
    %s13 = scalar_lea.sflag [#allocation6], 1
    %14 = vsyncpa %s13, 0
    %15 = vsyncpa [#allocation4], 0
    %s16 = scalar_lea.sflag [#allocation4], 1
    %17 = vsyncpa %s16, 0
    loop: start=0, step=1, limit=4
    $region2: #{tpu_custom_call.1} parent=1 // loop_pre_header
      _
    $region3: #{tpu_custom_call.1} parent=1 // loop_header
      %s19 = sphi 0, %s23
      %p20 = scmp.ge.s32.totalorder %s19, 4
      %s29 = sphi 0, %s31
      %s32 = sphi 0, %s29
      %s33 = sphi 0, %s32
      %s49 = sphi 0, %s33
      %s55 = sphi 0, %s57
      %s58 = sphi 0, %s55
      %s59 = sphi 0, %s58
      %s75 = sphi 0, %s59
      %s79 = sphi 0, %s79
      %s81 = sphi 0, %s79
      %s82 = sphi 0, %s81
      %s96 = sphi 0, %s82
      %s100 = sphi 0, %s100
      %s102 = sphi 0, %s100
      %s103 = sphi 0, %s102
      %s117 = sphi 0, %s103
      %s123 = sphi 0, %s125
      %s126 = sphi 0, %s123
      %s127 = sphi 0, %s126
      %s143 = sphi 0, %s127
    $region4: #{tpu_custom_call.1} parent=1 // loop_header_branch
      %22 = sbr.rel (%p20) target = $region8
    $region5: #{tpu_custom_call.1} parent=1 // loop_body
      %s24 = ssub.s32 %s19, 1
      %s25 = ssub.s32 %s19, 2
      %s26 = sadd.s32 %s19, 1
      %s27 = ssub.s32 %s19, %s26
      %p28 = scmp.eq.s32.totalorder %s27, 0
      %s30 = sadd.s32 %s29, 1
      %s31 = scalar_select %p28, %s29, %s30
      %p34 = pneg %p28
      %p35 = scmp.eq.s32.totalorder %s19, 1
      %p36 = por %p34, %p35
      %p37 = scmp.ne.s32.totalorder %s29, %s32
      %p38 = scmp.eq.s32.totalorder %s19, 0
      %p39 = por %p37, %p38
      %p40 = scmp.ne.s32.totalorder %s29, %s32
      %p41 = scmp.eq.s32.totalorder %s24, 1
      %p42 = por %p40, %p41
      %p43 = scmp.ne.s32.totalorder %s32, %s33
      %p44 = scmp.eq.s32.totalorder %s24, 0
      %p45 = por %p43, %p44
      %p46 = scmp.ne.s32.totalorder %s32, %s33
      %p47 = scmp.eq.s32.totalorder %s25, 1
      %p48 = por %p46, %p47
      %p50 = scmp.ne.s32.totalorder %s33, %s49
      %p51 = scmp.eq.s32.totalorder %s25, 0
      %p52 = por %p50, %p51
      %s53 = ssub.s32 %s19, %s26
      %p54 = scmp.eq.s32.totalorder %s53, 0
      %s56 = sadd.s32 %s55, 1
      %s57 = scalar_select %p54, %s55, %s56
      %p60 = pneg %p54
      %p61 = scmp.eq.s32.totalorder %s19, 1
      %p62 = por %p60, %p61
      %p63 = scmp.ne.s32.totalorder %s55, %s58
      %p64 = scmp.eq.s32.totalorder %s19, 0
      %p65 = por %p63, %p64
      %p66 = scmp.ne.s32.totalorder %s55, %s58
      %p67 = scmp.eq.s32.totalorder %s24, 1
      %p68 = por %p66, %p67
      %p69 = scmp.ne.s32.totalorder %s58, %s59
      %p70 = scmp.eq.s32.totalorder %s24, 0
      %p71 = por %p69, %p70
      %p72 = scmp.ne.s32.totalorder %s58, %s59
      %p73 = scmp.eq.s32.totalorder %s25, 1
      %p74 = por %p72, %p73
      %p76 = scmp.ne.s32.totalorder %s59, %s75
      %p77 = scmp.eq.s32.totalorder %s25, 0
      %p78 = por %p76, %p77
      %s80 = sadd.s32 %s79, 1
      %p83 = scmp.eq.s32.totalorder %s19, 1
      %p84 = scmp.ne.s32.totalorder %s79, %s81
      %p85 = scmp.eq.s32.totalorder %s19, 0
      %p86 = por %p84, %p85
      %p87 = scmp.ne.s32.totalorder %s79, %s81
      %p88 = scmp.eq.s32.totalorder %s24, 1
      %p89 = por %p87, %p88
      %p90 = scmp.ne.s32.totalorder %s81, %s82
      %p91 = scmp.eq.s32.totalorder %s24, 0
      %p92 = por %p90, %p91
      %p93 = scmp.ne.s32.totalorder %s81, %s82
      %p94 = scmp.eq.s32.totalorder %s25, 1
      %p95 = por %p93, %p94
      %p97 = scmp.ne.s32.totalorder %s82, %s96
      %p98 = scmp.eq.s32.totalorder %s25, 0
      %p99 = por %p97, %p98
      %s101 = sadd.s32 %s100, 1
      %p104 = scmp.eq.s32.totalorder %s19, 1
      %p105 = scmp.ne.s32.totalorder %s100, %s102
      %p106 = scmp.eq.s32.totalorder %s19, 0
      %p107 = por %p105, %p106
      %p108 = scmp.ne.s32.totalorder %s100, %s102
      %p109 = scmp.eq.s32.totalorder %s24, 1
      %p110 = por %p108, %p109
      %p111 = scmp.ne.s32.totalorder %s102, %s103
      %p112 = scmp.eq.s32.totalorder %s24, 0
      %p113 = por %p111, %p112
      %p114 = scmp.ne.s32.totalorder %s102, %s103
      %p115 = scmp.eq.s32.totalorder %s25, 1
      %p116 = por %p114, %p115
      %p118 = scmp.ne.s32.totalorder %s103, %s117
      %p119 = scmp.eq.s32.totalorder %s25, 0
      %p120 = por %p118, %p119
      %s121 = ssub.s32 %s19, %s26
      %p122 = scmp.eq.s32.totalorder %s121, 0
      %s124 = sadd.s32 %s123, 1
      %s125 = scalar_select %p122, %s123, %s124
      %p128 = pneg %p122
      %p129 = scmp.eq.s32.totalorder %s19, 1
      %p130 = por %p128, %p129
      %p131 = scmp.ne.s32.totalorder %s123, %s126
      %p132 = scmp.eq.s32.totalorder %s19, 0
      %p133 = por %p131, %p132
      %p134 = scmp.ne.s32.totalorder %s123, %s126
      %p135 = scmp.eq.s32.totalorder %s24, 1
      %p136 = por %p134, %p135
      %p137 = scmp.ne.s32.totalorder %s126, %s127
      %p138 = scmp.eq.s32.totalorder %s24, 0
      %p139 = por %p137, %p138
      %p140 = scmp.ne.s32.totalorder %s126, %s127
      %p141 = scmp.eq.s32.totalorder %s25, 1
      %p142 = por %p140, %p141
      %p144 = scmp.ne.s32.totalorder %s127, %s143
      %p145 = scmp.eq.s32.totalorder %s25, 0
      %p146 = por %p144, %p145
      %p147 = scmp.le.s32.totalorder 1, %s19
      %p148 = scmp.lt.s32.totalorder %s19, 3
      %p149 = pnand %p147, %p148
      %p150 = pneg %p149
      // Predicated region
      $region9: #{tpu_custom_call.1} parent=5 // pred_check
        _
      $region10: #{tpu_custom_call.1} parent=5 // pred_check_branch
        %152 = sbr.rel (%p149) target = $region12
      $region11: #{tpu_custom_call.1} parent=5 // pred_region
        %s153 = ssub.s32 %s19, 1
        // Predicated region
        $region13: #{tpu_custom_call.1} parent=11 // pred_check
          %p154 = pneg %p92
        $region14: #{tpu_custom_call.1} parent=11 // pred_check_branch
          %156 = sbr.rel (%p154) target = $region16
        $region15: #{tpu_custom_call.1} parent=11 // pred_region
          %s158 = ssub.s32 768, 768
          %159 = vsyncadd [#allocation6], %s158
          %s160 = sshll.u32 [#allocation7], 4
          %s161 = int_to_ptr.vmem [resolvable:$true] %s160
          %166 = dma.hbm_to_vmem [thread:$0]  %s2, 768, %s161, [#allocation6], 384, 384, 24
        $region16: #{tpu_custom_call.1} parent=11 // pred_fallthru
          _
        // Predicated region
        $region17: #{tpu_custom_call.1} parent=11 // pred_check
          %p167 = pneg %p113
        $region18: #{tpu_custom_call.1} parent=11 // pred_check_branch
          %169 = sbr.rel (%p167) target = $region20
        $region19: #{tpu_custom_call.1} parent=11 // pred_region
          _
        $region20: #{tpu_custom_call.1} parent=11 // pred_fallthru
          _
      $region12: #{tpu_custom_call.1} parent=5 // pred_fallthru
        _
      %p170 = scmp.lt.s32.totalorder %s19, 2
      // Predicated region
      $region21: #{tpu_custom_call.1} parent=5 // pred_check
        %p171 = pneg %p170
      $region22: #{tpu_custom_call.1} parent=5 // pred_check_branch
        %173 = sbr.rel (%p171) target = $region24
      $region23: #{tpu_custom_call.1} parent=5 // pred_region
        // Predicated region
        $region25: #{tpu_custom_call.1} parent=23 // pred_check
          %p174 = pneg %p39
        $region26: #{tpu_custom_call.1} parent=23 // pred_check_branch
          %176 = sbr.rel (%p174) target = $region28
        $region27: #{tpu_custom_call.1} parent=23 // pred_region
          %s177 = sand.u32 %s29, 1
          %s178 = scalar_lea.sflag [#allocation3], %s177
          %s179 = sand.u32 %s29, 1
          %s180 = smul.addr %s179, 8
          %s181 = scalar_lea.vmem [#allocation2], %s180
          %s183 = ssub.s32 128, 128
          %184 = vsyncadd %s178, %s183
          %s185 = smul.addr %s19, 128
          %s186 = scalar_lea.hbm %s0, %s185
          %s188 = sshll.u32 %s181, 4
          %s189 = int_to_ptr.vmem [resolvable:$true] %s188
          %191 = dma.hbm_to_vmem [thread:$0]  %s186, 128, %s189, %s178
        $region28: #{tpu_custom_call.1} parent=23 // pred_fallthru
          _
        // Predicated region
        $region29: #{tpu_custom_call.1} parent=23 // pred_check
          %p192 = pneg %p65
        $region30: #{tpu_custom_call.1} parent=23 // pred_check_branch
          %194 = sbr.rel (%p192) target = $region32
        $region31: #{tpu_custom_call.1} parent=23 // pred_region
          %s195 = sand.u32 %s19, 1
          %s196 = scalar_lea.sflag [#allocation6], %s195
          %s197 = sand.u32 %s55, 1
          %s198 = smul.addr %s197, 8
          %s199 = scalar_lea.vmem [#allocation5], %s198
          %s201 = ssub.s32 128, 128
          %202 = vsyncadd %s196, %s201
          %s203 = smul.addr %s19, 128
          %s204 = scalar_lea.hbm %s1, %s203
          %s206 = sshll.u32 %s199, 4
          %s207 = int_to_ptr.vmem [resolvable:$true] %s206
          %209 = dma.hbm_to_vmem [thread:$0]  %s204, 128, %s207, %s196
        $region32: #{tpu_custom_call.1} parent=23 // pred_fallthru
          _
      $region24: #{tpu_custom_call.1} parent=5 // pred_fallthru
        _
      %p210 = scmp.le.s32.totalorder 1, %s19
      %p211 = scmp.lt.s32.totalorder %s19, 3
      %p212 = pnand %p210, %p211
      %p213 = pneg %p212
      // Predicated region
      $region33: #{tpu_custom_call.1} parent=5 // pred_check
        _
      $region34: #{tpu_custom_call.1} parent=5 // pred_check_branch
        %215 = sbr.rel (%p212) target = $region36
      $region35: #{tpu_custom_call.1} parent=5 // pred_region
        %s216 = ssub.s32 %s19, 1
        %s217 = sand.u32 %s32, 1
        %s218 = scalar_lea.sflag [#allocation3], %s217
        %s219 = sand.u32 %s32, 1
        %s220 = smul.addr %s219, 8
        %s221 = scalar_lea.vmem [#allocation2], %s220
        // Predicated region
        $region37: #{tpu_custom_call.1} parent=35 // pred_check
          %p222 = pneg %p45
        $region38: #{tpu_custom_call.1} parent=35 // pred_check_branch
          %224 = sbr.rel (%p222) target = $region40
        $region39: #{tpu_custom_call.1} parent=35 // pred_region
          %225 = dma.done %s218, 128
        $region40: #{tpu_custom_call.1} parent=35 // pred_fallthru
          _
        %s226 = sand.u32 %s24, 1
        %s227 = scalar_lea.sflag [#allocation6], %s226
        %s228 = sand.u32 %s58, 1
        %s229 = smul.addr %s228, 8
        %s230 = scalar_lea.vmem [#allocation5], %s229
        // Predicated region
        $region41: #{tpu_custom_call.1} parent=35 // pred_check
          %p231 = pneg %p71
        $region42: #{tpu_custom_call.1} parent=35 // pred_check_branch
          %233 = sbr.rel (%p231) target = $region44
        $region43: #{tpu_custom_call.1} parent=35 // pred_region
          %234 = dma.done %s227, 128
        $region44: #{tpu_custom_call.1} parent=35 // pred_fallthru
          _
        // Predicated region
        $region45: #{tpu_custom_call.1} parent=35 // pred_check
          %p235 = pneg %p92
        $region46: #{tpu_custom_call.1} parent=35 // pred_check_branch
          %237 = sbr.rel (%p235) target = $region48
        $region47: #{tpu_custom_call.1} parent=35 // pred_region
          %238 = dma.done [#allocation6], 768
        $region48: #{tpu_custom_call.1} parent=35 // pred_fallthru
          _
        %s239 = sand.u32 %s32, 1
        %s240 = scalar_lea.sflag [#allocation3], %s239
        %s241 = sand.u32 %s32, 1
        %s242 = smul.addr %s241, 8
        %s243 = scalar_lea.vmem [#allocation2], %s242
        %p244 = pneg %p45
        %p245 = pneg %p42
        %s246 = sand.u32 %s24, 1
        %s247 = scalar_lea.sflag [#allocation6], %s246
        %s248 = sand.u32 %s58, 1
        %s249 = smul.addr %s248, 8
        %s250 = scalar_lea.vmem [#allocation5], %s249
        %p251 = pneg %p71
        %p252 = pneg %p68
        %p253 = pneg %p92
        %p254 = pneg %p89
        %p255 = pneg %p113
        %p256 = pneg %p110
        %p257 = pneg %p139
        %p258 = pneg %p136
        %s259 = sand.u32 %s126, 1
        %s260 = scalar_lea.sflag [#allocation4], %s259
        %s261 = sand.u32 %s126, 1
        %s262 = smul.addr %s261, 8
        %s263 = scalar_lea.vmem [#allocation8], %s262
        %v264 = vld [vmem:[%s221] sm:$0xff]
        %v265 = vld [vmem:[%s230] sm:$0xff]
        %v266 = vld [vmem:[#allocation7] sm:$0xff]
        %v267 = vld [vmem:[#allocation7 + $0x8] sm:$0xff]
        %v268 = vld [vmem:[#allocation7 + $0x10] sm:$0xff]
        %v269 = vld [vmem:[#allocation7 + $0x18] sm:$0xff]
        %v270 = vld [vmem:[#allocation7 + $0x20] sm:$0xff]
        %v271 = vld [vmem:[#allocation7 + $0x28] sm:$0xff]
        %vm272 = vcmask 130048
        %v274 = vsel %vm272, %v264, 0
        %v276 = vand.u32 %v267, 4294901760
        %277 = vmatprep.subr.mxu0 %v276
        %v278 = vand.u32 %v266, 4294901760
        %279 = vmatpush1.msra.mxu0 %v278
        %v280 = vand.u32 %v270, 4294901760
        %281 = vmatprep.subr.mxu0 %v280
        %v282 = vand.u32 %v269, 4294901760
        %283 = vmatpush1.msra.mxu0 %v282
        %284 = vmatprep.subr.mxu0 0.0
        %285 = vmatpush1.msra.mxu0 0.0
        %286 = vmatprep.subr.mxu0 0.0
        %287 = vmatpush1.msra.mxu0 0.0
        %288 = vmatprep.subr.mxu0 0.0
        %289 = vmatpush1.msra.mxu0 0.0
        %290 = vmatprep.subr.mxu0 0.0
        %291 = vmatpush1.msra.mxu0 0.0
        %292 = vmatprep.subr.mxu0 0.0
        %293 = vmatpush1.msra.mxu0 0.0
        %294 = vmatprep.subr.mxu0 0.0
        %295 = vmatpush1.msra.mxu0 0.0
        %296 = vmatprep.subr.mxu0 0.0
        %297 = vmatpush1.msra.mxu0 0.0
        %298 = vmatprep.subr.mxu0 0.0
        %299 = vmatpush1.msra.mxu0 0.0
        %300 = vmatprep.subr.mxu0 0.0
        %301 = vmatpush1.msra.mxu0 0.0
        %302 = vmatprep.subr.mxu0 0.0
        %303 = vmatpush1.msra.mxu0 0.0
        %304 = vmatprep.subr.mxu0 0.0
        %305 = vmatpush1.msra.mxu0 0.0
        %306 = vmatprep.subr.mxu0 0.0
        %307 = vmatpush1.msra.mxu0 0.0
        %308 = vmatprep.subr.mxu0 0.0
        %309 = vmatpush1.msra.mxu0 0.0
        %310 = vmatprep.subr.mxu0 0.0
        %311 = vmatpush1.msra.mxu0 0.0
        %312 = vmatprep.subr.mxu0 0.0
        %313 = vmatpush1.msra.mxu0 0.0
        %314 = vmatprep.subr.mxu0 0.0
        %315 = vmatpush1.msra.mxu0 0.0
        %316 = vmatprep.subr.mxu0 0.0
        %317 = vmatpush1.msra.mxu0 0.0
        %318 = vmatprep.subr.mxu0 0.0
        %319 = vmatpush1.msra.mxu0 0.0
        %320 = vmatprep.subr.mxu0 0.0
        %321 = vmatpush1.msra.mxu0 0.0
        %322 = vmatprep.subr.mxu0 0.0
        %323 = vmatpush1.msra.mxu0 0.0
        %324 = vmatprep.subr.mxu0 0.0
        %325 = vmatpush1.msra.mxu0 0.0
        %326 = vmatprep.subr.mxu0 0.0
        %327 = vmatpush1.msra.mxu0 0.0
        %328 = vmatprep.subr.mxu0 0.0
        %329 = vmatpush1.msra.mxu0 0.0
        %330 = vmatprep.subr.mxu0 0.0
        %331 = vmatpush1.msra.mxu0 0.0
        %332 = vmatprep.subr.mxu0 0.0
        %333 = vmatpush1.msra.mxu0 0.0
        %334 = vmatprep.subr.mxu0 0.0
        %335 = vmatpush1.msra.mxu0 0.0
        %336 = vmatprep.subr.mxu0 0.0
        %337 = vmatpush1.msra.mxu0 0.0
        %338 = vmatprep.subr.mxu0 0.0
        %339 = vmatpush1.msra.mxu0 0.0
        %340 = vmatprep.subr.mxu0 0.0
        %341 = vmatpush1.msra.mxu0 0.0
        %342 = vmatprep.subr.mxu0 0.0
        %343 = vmatpush1.msra.mxu0 0.0
        %344 = vmatprep.mubr.f32.mxu0 0.0
        %v345 = vand.u32 %v274, 4294901760
        %v346 = vsub.f32 %v274, %v345
        %v347 = vand.u32 %v346, 4294901760
        %v348 = vsub.f32 %v346, %v347
        %v349 = vand.u32 %v348, 4294901760
        %350 = vmatmul.mubr.f32.gmra.mrb[0].mxu0 %v349
        %v351 = vpop.f32.mrb[0].mxu0
        %v352 = vadd.f32 0.0, %v351
        %v353 = vpop.f32.mrb[0].mxu0
        %v354 = vadd.f32 0.0, %v353
        %355 = vdwg.mxu0
        %v356 = vand.u32 %v267, 4294901760
        %v357 = vsub.f32 %v267, %v356
        %v358 = vand.u32 %v357, 4294901760
        %v359 = vsub.f32 %v357, %v358
        %v360 = vand.u32 %v359, 4294901760
        %361 = vmatprep.subr.mxu0 %v360
        %v362 = vand.u32 %v266, 4294901760
        %v363 = vsub.f32 %v266, %v362
        %v364 = vand.u32 %v363, 4294901760
        %v365 = vsub.f32 %v363, %v364
        %v366 = vand.u32 %v365, 4294901760
        %367 = vmatpush1.msra.mxu0 %v366
        %v368 = vand.u32 %v270, 4294901760
        %v369 = vsub.f32 %v270, %v368
        %v370 = vand.u32 %v369, 4294901760
        %v371 = vsub.f32 %v369, %v370
        %v372 = vand.u32 %v371, 4294901760
        %373 = vmatprep.subr.mxu0 %v372
        %v374 = vand.u32 %v269, 4294901760
        %v375 = vsub.f32 %v269, %v374
        %v376 = vand.u32 %v375, 4294901760
        %v377 = vsub.f32 %v375, %v376
        %v378 = vand.u32 %v377, 4294901760
        %379 = vmatpush1.msra.mxu0 %v378
        %380 = vmatprep.subr.mxu0 0.0
        %381 = vmatpush1.msra.mxu0 0.0
        %382 = vmatprep.subr.mxu0 0.0
        %383 = vmatpush1.msra.mxu0 0.0
        %384 = vmatprep.subr.mxu0 0.0
        %385 = vmatpush1.msra.mxu0 0.0
        %386 = vmatprep.subr.mxu0 0.0
        %387 = vmatpush1.msra.mxu0 0.0
        %388 = vmatprep.subr.mxu0 0.0
        %389 = vmatpush1.msra.mxu0 0.0
        %390 = vmatprep.subr.mxu0 0.0
        %391 = vmatpush1.msra.mxu0 0.0
        %392 = vmatprep.subr.mxu0 0.0
        %393 = vmatpush1.msra.mxu0 0.0
        %394 = vmatprep.subr.mxu0 0.0
        %395 = vmatpush1.msra.mxu0 0.0
        %396 = vmatprep.subr.mxu0 0.0
        %397 = vmatpush1.msra.mxu0 0.0
        %398 = vmatprep.subr.mxu0 0.0
        %399 = vmatpush1.msra.mxu0 0.0
        %400 = vmatprep.subr.mxu0 0.0
        %401 = vmatpush1.msra.mxu0 0.0
        %402 = vmatprep.subr.mxu0 0.0
        %403 = vmatpush1.msra.mxu0 0.0
        %404 = vmatprep.subr.mxu0 0.0
        %405 = vmatpush1.msra.mxu0 0.0
        %406 = vmatprep.subr.mxu0 0.0
        %407 = vmatpush1.msra.mxu0 0.0
        %408 = vmatprep.subr.mxu0 0.0
        %409 = vmatpush1.msra.mxu0 0.0
        %410 = vmatprep.subr.mxu0 0.0
        %411 = vmatpush1.msra.mxu0 0.0
        %412 = vmatprep.subr.mxu0 0.0
        %413 = vmatpush1.msra.mxu0 0.0
        %414 = vmatprep.subr.mxu0 0.0
        %415 = vmatpush1.msra.mxu0 0.0
        %416 = vmatprep.subr.mxu0 0.0
        %417 = vmatpush1.msra.mxu0 0.0
        %418 = vmatprep.subr.mxu0 0.0
        %419 = vmatpush1.msra.mxu0 0.0
        %420 = vmatprep.subr.mxu0 0.0
        %421 = vmatpush1.msra.mxu0 0.0
        %422 = vmatprep.subr.mxu0 0.0
        %423 = vmatpush1.msra.mxu0 0.0
        %424 = vmatprep.subr.mxu0 0.0
        %425 = vmatpush1.msra.mxu0 0.0
        %426 = vmatprep.subr.mxu0 0.0
        %427 = vmatpush1.msra.mxu0 0.0
        %428 = vmatprep.subr.mxu0 0.0
        %429 = vmatpush1.msra.mxu0 0.0
        %430 = vmatprep.subr.mxu0 0.0
        %431 = vmatpush1.msra.mxu0 0.0
        %432 = vmatprep.subr.mxu0 0.0
        %433 = vmatpush1.msra.mxu0 0.0
        %434 = vmatprep.subr.mxu0 0.0
        %435 = vmatpush1.msra.mxu0 0.0
        %436 = vmatprep.subr.mxu0 0.0
        %437 = vmatpush1.msra.mxu0 0.0
        %438 = vmatprep.subr.mxu0 0.0
        %439 = vmatpush1.msra.mxu0 0.0
        %440 = vmatprep.mubr.f32.mxu0 0.0
        %v441 = vand.u32 %v274, 4294901760
        %442 = vmatmul.mubr.f32.gmra.mrb[0].mxu0 %v441
        %v443 = vpop.f32.mrb[0].mxu0
        %v444 = vadd.f32 %v352, %v443
        %v445 = vpop.f32.mrb[0].mxu0
        %v446 = vadd.f32 %v354, %v445
        %447 = vdwg.mxu0
        %v448 = vand.u32 %v267, 4294901760
        %v449 = vsub.f32 %v267, %v448
        %450 = vmatprep.subr.mxu0 %v449
        %v451 = vand.u32 %v266, 4294901760
        %v452 = vsub.f32 %v266, %v451
        %453 = vmatpush1.msra.mxu0 %v452
        %v454 = vand.u32 %v270, 4294901760
        %v455 = vsub.f32 %v270, %v454
        %456 = vmatprep.subr.mxu0 %v455
        %v457 = vand.u32 %v269, 4294901760
        %v458 = vsub.f32 %v269, %v457
        %459 = vmatpush1.msra.mxu0 %v458
        %460 = vmatprep.subr.mxu0 0.0
        %461 = vmatpush1.msra.mxu0 0.0
        %462 = vmatprep.subr.mxu0 0.0
        %463 = vmatpush1.msra.mxu0 0.0
        %464 = vmatprep.subr.mxu0 0.0
        %465 = vmatpush1.msra.mxu0 0.0
        %466 = vmatprep.subr.mxu0 0.0
        %467 = vmatpush1.msra.mxu0 0.0
        %468 = vmatprep.subr.mxu0 0.0
        %469 = vmatpush1.msra.mxu0 0.0
        %470 = vmatprep.subr.mxu0 0.0
        %471 = vmatpush1.msra.mxu0 0.0
        %472 = vmatprep.subr.mxu0 0.0
        %473 = vmatpush1.msra.mxu0 0.0
        %474 = vmatprep.subr.mxu0 0.0
        %475 = vmatpush1.msra.mxu0 0.0
        %476 = vmatprep.subr.mxu0 0.0
        %477 = vmatpush1.msra.mxu0 0.0
        %478 = vmatprep.subr.mxu0 0.0
        %479 = vmatpush1.msra.mxu0 0.0
        %480 = vmatprep.subr.mxu0 0.0
        %481 = vmatpush1.msra.mxu0 0.0
        %482 = vmatprep.subr.mxu0 0.0
        %483 = vmatpush1.msra.mxu0 0.0
        %484 = vmatprep.subr.mxu0 0.0
        %485 = vmatpush1.msra.mxu0 0.0
        %486 = vmatprep.subr.mxu0 0.0
        %487 = vmatpush1.msra.mxu0 0.0
        %488 = vmatprep.subr.mxu0 0.0
        %489 = vmatpush1.msra.mxu0 0.0
        %490 = vmatprep.subr.mxu0 0.0
        %491 = vmatpush1.msra.mxu0 0.0
        %492 = vmatprep.subr.mxu0 0.0
        %493 = vmatpush1.msra.mxu0 0.0
        %494 = vmatprep.subr.mxu0 0.0
        %495 = vmatpush1.msra.mxu0 0.0
        %496 = vmatprep.subr.mxu0 0.0
        %497 = vmatpush1.msra.mxu0 0.0
        %498 = vmatprep.subr.mxu0 0.0
        %499 = vmatpush1.msra.mxu0 0.0
        %500 = vmatprep.subr.mxu0 0.0
        %501 = vmatpush1.msra.mxu0 0.0
        %502 = vmatprep.subr.mxu0 0.0
        %503 = vmatpush1.msra.mxu0 0.0
        %504 = vmatprep.subr.mxu0 0.0
        %505 = vmatpush1.msra.mxu0 0.0
        %506 = vmatprep.subr.mxu0 0.0
        %507 = vmatpush1.msra.mxu0 0.0
        %508 = vmatprep.subr.mxu0 0.0
        %509 = vmatpush1.msra.mxu0 0.0
        %510 = vmatprep.subr.mxu0 0.0
        %511 = vmatpush1.msra.mxu0 0.0
        %512 = vmatprep.subr.mxu0 0.0
        %513 = vmatpush1.msra.mxu0 0.0
        %514 = vmatprep.subr.mxu0 0.0
        %515 = vmatpush1.msra.mxu0 0.0
        %516 = vmatprep.subr.mxu0 0.0
        %517 = vmatpush1.msra.mxu0 0.0
        %518 = vmatprep.subr.mxu0 0.0
        %519 = vmatpush1.msra.mxu0 0.0
        %520 = vmatprep.mubr.f32.mxu0 0.0
        %v521 = vand.u32 %v274, 4294901760
        %v522 = vsub.f32 %v274, %v521
        %523 = vmatmul.mubr.f32.gmra.mrb[0].mxu0 %v522
        %v524 = vpop.f32.mrb[0].mxu0
        %v525 = vadd.f32 %v444, %v524
        %v526 = vpop.f32.mrb[0].mxu0
        %v527 = vadd.f32 %v446, %v526
        %528 = vdwg.mxu0
        %v529 = vand.u32 %v267, 4294901760
        %530 = vmatprep.subr.mxu0 %v529
        %v531 = vand.u32 %v266, 4294901760
        %532 = vmatpush1.msra.mxu0 %v531
        %v533 = vand.u32 %v270, 4294901760
        %534 = vmatprep.subr.mxu0 %v533
        %v535 = vand.u32 %v269, 4294901760
        %536 = vmatpush1.msra.mxu0 %v535
        %537 = vmatprep.subr.mxu0 0.0
        %538 = vmatpush1.msra.mxu0 0.0
        %539 = vmatprep.subr.mxu0 0.0
        %540 = vmatpush1.msra.mxu0 0.0
        %541 = vmatprep.subr.mxu0 0.0
        %542 = vmatpush1.msra.mxu0 0.0
        %543 = vmatprep.subr.mxu0 0.0
        %544 = vmatpush1.msra.mxu0 0.0
        %545 = vmatprep.subr.mxu0 0.0
        %546 = vmatpush1.msra.mxu0 0.0
        %547 = vmatprep.subr.mxu0 0.0
        %548 = vmatpush1.msra.mxu0 0.0
        %549 = vmatprep.subr.mxu0 0.0
        %550 = vmatpush1.msra.mxu0 0.0
        %551 = vmatprep.subr.mxu0 0.0
        %552 = vmatpush1.msra.mxu0 0.0
        %553 = vmatprep.subr.mxu0 0.0
        %554 = vmatpush1.msra.mxu0 0.0
        %555 = vmatprep.subr.mxu0 0.0
        %556 = vmatpush1.msra.mxu0 0.0
        %557 = vmatprep.subr.mxu0 0.0
        %558 = vmatpush1.msra.mxu0 0.0
        %559 = vmatprep.subr.mxu0 0.0
        %560 = vmatpush1.msra.mxu0 0.0
        %561 = vmatprep.subr.mxu0 0.0
        %562 = vmatpush1.msra.mxu0 0.0
        %563 = vmatprep.subr.mxu0 0.0
        %564 = vmatpush1.msra.mxu0 0.0
        %565 = vmatprep.subr.mxu0 0.0
        %566 = vmatpush1.msra.mxu0 0.0
        %567 = vmatprep.subr.mxu0 0.0
        %568 = vmatpush1.msra.mxu0 0.0
        %569 = vmatprep.subr.mxu0 0.0
        %570 = vmatpush1.msra.mxu0 0.0
        %571 = vmatprep.subr.mxu0 0.0
        %572 = vmatpush1.msra.mxu0 0.0
        %573 = vmatprep.subr.mxu0 0.0
        %574 = vmatpush1.msra.mxu0 0.0
        %575 = vmatprep.subr.mxu0 0.0
        %576 = vmatpush1.msra.mxu0 0.0
        %577 = vmatprep.subr.mxu0 0.0
        %578 = vmatpush1.msra.mxu0 0.0
        %579 = vmatprep.subr.mxu0 0.0
        %580 = vmatpush1.msra.mxu0 0.0
        %581 = vmatprep.subr.mxu0 0.0
        %582 = vmatpush1.msra.mxu0 0.0
        %583 = vmatprep.subr.mxu0 0.0
        %584 = vmatpush1.msra.mxu0 0.0
        %585 = vmatprep.subr.mxu0 0.0
        %586 = vmatpush1.msra.mxu0 0.0
        %587 = vmatprep.subr.mxu0 0.0
        %588 = vmatpush1.msra.mxu0 0.0
        %589 = vmatprep.subr.mxu0 0.0
        %590 = vmatpush1.msra.mxu0 0.0
        %591 = vmatprep.subr.mxu0 0.0
        %592 = vmatpush1.msra.mxu0 0.0
        %593 = vmatprep.subr.mxu0 0.0
        %594 = vmatpush1.msra.mxu0 0.0
        %595 = vmatprep.subr.mxu0 0.0
        %596 = vmatpush1.msra.mxu0 0.0
        %597 = vmatprep.mubr.f32.mxu0 0.0
        %v598 = vand.u32 %v274, 4294901760
        %v599 = vsub.f32 %v274, %v598
        %v600 = vand.u32 %v599, 4294901760
        %601 = vmatmul.mubr.f32.gmra.mrb[0].mxu0 %v600
        %v602 = vpop.f32.mrb[0].mxu0
        %v603 = vadd.f32 %v525, %v602
        %v604 = vpop.f32.mrb[0].mxu0
        %v605 = vadd.f32 %v527, %v604
        %606 = vdwg.mxu0
        %v607 = vand.u32 %v267, 4294901760
        %v608 = vsub.f32 %v267, %v607
        %v609 = vand.u32 %v608, 4294901760
        %610 = vmatprep.subr.mxu0 %v609
        %v611 = vand.u32 %v266, 4294901760
        %v612 = vsub.f32 %v266, %v611
        %v613 = vand.u32 %v612, 4294901760
        %614 = vmatpush1.msra.mxu0 %v613
        %v615 = vand.u32 %v270, 4294901760
        %v616 = vsub.f32 %v270, %v615
        %v617 = vand.u32 %v616, 4294901760
        %618 = vmatprep.subr.mxu0 %v617
        %v619 = vand.u32 %v269, 4294901760
        %v620 = vsub.f32 %v269, %v619
        %v621 = vand.u32 %v620, 4294901760
        %622 = vmatpush1.msra.mxu0 %v621
        %623 = vmatprep.subr.mxu0 0.0
        %624 = vmatpush1.msra.mxu0 0.0
        %625 = vmatprep.subr.mxu0 0.0
        %626 = vmatpush1.msra.mxu0 0.0
        %627 = vmatprep.subr.mxu0 0.0
        %628 = vmatpush1.msra.mxu0 0.0
        %629 = vmatprep.subr.mxu0 0.0
        %630 = vmatpush1.msra.mxu0 0.0
        %631 = vmatprep.subr.mxu0 0.0
        %632 = vmatpush1.msra.mxu0 0.0
        %633 = vmatprep.subr.mxu0 0.0
        %634 = vmatpush1.msra.mxu0 0.0
        %635 = vmatprep.subr.mxu0 0.0
        %636 = vmatpush1.msra.mxu0 0.0
        %637 = vmatprep.subr.mxu0 0.0
        %638 = vmatpush1.msra.mxu0 0.0
        %639 = vmatprep.subr.mxu0 0.0
        %640 = vmatpush1.msra.mxu0 0.0
        %641 = vmatprep.subr.mxu0 0.0
        %642 = vmatpush1.msra.mxu0 0.0
        %643 = vmatprep.subr.mxu0 0.0
        %644 = vmatpush1.msra.mxu0 0.0
        %645 = vmatprep.subr.mxu0 0.0
        %646 = vmatpush1.msra.mxu0 0.0
        %647 = vmatprep.subr.mxu0 0.0
        %648 = vmatpush1.msra.mxu0 0.0
        %649 = vmatprep.subr.mxu0 0.0
        %650 = vmatpush1.msra.mxu0 0.0
        %651 = vmatprep.subr.mxu0 0.0
        %652 = vmatpush1.msra.mxu0 0.0
        %653 = vmatprep.subr.mxu0 0.0
        %654 = vmatpush1.msra.mxu0 0.0
        %655 = vmatprep.subr.mxu0 0.0
        %656 = vmatpush1.msra.mxu0 0.0
        %657 = vmatprep.subr.mxu0 0.0
        %658 = vmatpush1.msra.mxu0 0.0
        %659 = vmatprep.subr.mxu0 0.0
        %660 = vmatpush1.msra.mxu0 0.0
        %661 = vmatprep.subr.mxu0 0.0
        %662 = vmatpush1.msra.mxu0 0.0
        %663 = vmatprep.subr.mxu0 0.0
        %664 = vmatpush1.msra.mxu0 0.0
        %665 = vmatprep.subr.mxu0 0.0
        %666 = vmatpush1.msra.mxu0 0.0
        %667 = vmatprep.subr.mxu0 0.0
        %668 = vmatpush1.msra.mxu0 0.0
        %669 = vmatprep.subr.mxu0 0.0
        %670 = vmatpush1.msra.mxu0 0.0
        %671 = vmatprep.subr.mxu0 0.0
        %672 = vmatpush1.msra.mxu0 0.0
        %673 = vmatprep.subr.mxu0 0.0
        %674 = vmatpush1.msra.mxu0 0.0
        %675 = vmatprep.subr.mxu0 0.0
        %676 = vmatpush1.msra.mxu0 0.0
        %677 = vmatprep.subr.mxu0 0.0
        %678 = vmatpush1.msra.mxu0 0.0
        %679 = vmatprep.subr.mxu0 0.0
        %680 = vmatpush1.msra.mxu0 0.0
        %681 = vmatprep.subr.mxu0 0.0
        %682 = vmatpush1.msra.mxu0 0.0
        %683 = vmatprep.mubr.f32.mxu0 0.0
        %v684 = vand.u32 %v274, 4294901760
        %685 = vmatmul.mubr.f32.gmra.mrb[0].mxu0 %v684
        %v686 = vpop.f32.mrb[0].mxu0
        %v687 = vadd.f32 %v603, %v686
        %v688 = vpop.f32.mrb[0].mxu0
        %v689 = vadd.f32 %v605, %v688
        %690 = vdwg.mxu0
        %v691 = vand.u32 %v267, 4294901760
        %692 = vmatprep.subr.mxu0 %v691
        %v693 = vand.u32 %v266, 4294901760
        %694 = vmatpush1.msra.mxu0 %v693
        %v695 = vand.u32 %v270, 4294901760
        %696 = vmatprep.subr.mxu0 %v695
        %v697 = vand.u32 %v269, 4294901760
        %698 = vmatpush1.msra.mxu0 %v697
        %699 = vmatprep.subr.mxu0 0.0
        %700 = vmatpush1.msra.mxu0 0.0
        %701 = vmatprep.subr.mxu0 0.0
        %702 = vmatpush1.msra.mxu0 0.0
        %703 = vmatprep.subr.mxu0 0.0
        %704 = vmatpush1.msra.mxu0 0.0
        %705 = vmatprep.subr.mxu0 0.0
        %706 = vmatpush1.msra.mxu0 0.0
        %707 = vmatprep.subr.mxu0 0.0
        %708 = vmatpush1.msra.mxu0 0.0
        %709 = vmatprep.subr.mxu0 0.0
        %710 = vmatpush1.msra.mxu0 0.0
        %711 = vmatprep.subr.mxu0 0.0
        %712 = vmatpush1.msra.mxu0 0.0
        %713 = vmatprep.subr.mxu0 0.0
        %714 = vmatpush1.msra.mxu0 0.0
        %715 = vmatprep.subr.mxu0 0.0
        %716 = vmatpush1.msra.mxu0 0.0
        %717 = vmatprep.subr.mxu0 0.0
        %718 = vmatpush1.msra.mxu0 0.0
        %719 = vmatprep.subr.mxu0 0.0
        %720 = vmatpush1.msra.mxu0 0.0
        %721 = vmatprep.subr.mxu0 0.0
        %722 = vmatpush1.msra.mxu0 0.0
        %723 = vmatprep.subr.mxu0 0.0
        %724 = vmatpush1.msra.mxu0 0.0
        %725 = vmatprep.subr.mxu0 0.0
        %726 = vmatpush1.msra.mxu0 0.0
        %727 = vmatprep.subr.mxu0 0.0
        %728 = vmatpush1.msra.mxu0 0.0
        %729 = vmatprep.subr.mxu0 0.0
        %730 = vmatpush1.msra.mxu0 0.0
        %731 = vmatprep.subr.mxu0 0.0
        %732 = vmatpush1.msra.mxu0 0.0
        %733 = vmatprep.subr.mxu0 0.0
        %734 = vmatpush1.msra.mxu0 0.0
        %735 = vmatprep.subr.mxu0 0.0
        %736 = vmatpush1.msra.mxu0 0.0
        %737 = vmatprep.subr.mxu0 0.0
        %738 = vmatpush1.msra.mxu0 0.0
        %739 = vmatprep.subr.mxu0 0.0
        %740 = vmatpush1.msra.mxu0 0.0
        %741 = vmatprep.subr.mxu0 0.0
        %742 = vmatpush1.msra.mxu0 0.0
        %743 = vmatprep.subr.mxu0 0.0
        %744 = vmatpush1.msra.mxu0 0.0
        %745 = vmatprep.subr.mxu0 0.0
        %746 = vmatpush1.msra.mxu0 0.0
        %747 = vmatprep.subr.mxu0 0.0
        %748 = vmatpush1.msra.mxu0 0.0
        %749 = vmatprep.subr.mxu0 0.0
        %750 = vmatpush1.msra.mxu0 0.0
        %751 = vmatprep.subr.mxu0 0.0
        %752 = vmatpush1.msra.mxu0 0.0
        %753 = vmatprep.subr.mxu0 0.0
        %754 = vmatpush1.msra.mxu0 0.0
        %755 = vmatprep.subr.mxu0 0.0
        %756 = vmatpush1.msra.mxu0 0.0
        %757 = vmatprep.subr.mxu0 0.0
        %758 = vmatpush1.msra.mxu0 0.0
        %759 = vmatprep.mubr.f32.mxu0 0.0
        %v760 = vand.u32 %v274, 4294901760
        %761 = vmatmul.mubr.f32.gmra.mrb[0].mxu0 %v760
        %v762 = vpop.f32.mrb[0].mxu0
        %v763 = vadd.f32 %v687, %v762
        %v764 = vpop.f32.mrb[0].mxu0
        %v765 = vadd.f32 %v689, %v764
        %766 = vdwg.mxu0
        %767 = vmatprep.subr.mxu0 0.0
        %v768 = vand.u32 %v268, 4294901760
        %769 = vmatpush1.msra.mxu0 %v768
        %770 = vmatprep.subr.mxu0 0.0
        %v771 = vand.u32 %v271, 4294901760
        %772 = vmatpush1.msra.mxu0 %v771
        %773 = vmatprep.subr.mxu0 0.0
        %774 = vmatpush1.msra.mxu0 0.0
        %775 = vmatprep.subr.mxu0 0.0
        %776 = vmatpush1.msra.mxu0 0.0
        %777 = vmatprep.subr.mxu0 0.0
        %778 = vmatpush1.msra.mxu0 0.0
        %779 = vmatprep.subr.mxu0 0.0
        %780 = vmatpush1.msra.mxu0 0.0
        %781 = vmatprep.subr.mxu0 0.0
        %782 = vmatpush1.msra.mxu0 0.0
        %783 = vmatprep.subr.mxu0 0.0
        %784 = vmatpush1.msra.mxu0 0.0
        %785 = vmatprep.subr.mxu0 0.0
        %786 = vmatpush1.msra.mxu0 0.0
        %787 = vmatprep.subr.mxu0 0.0
        %788 = vmatpush1.msra.mxu0 0.0
        %789 = vmatprep.subr.mxu0 0.0
        %790 = vmatpush1.msra.mxu0 0.0
        %791 = vmatprep.subr.mxu0 0.0
        %792 = vmatpush1.msra.mxu0 0.0
        %793 = vmatprep.subr.mxu0 0.0
        %794 = vmatpush1.msra.mxu0 0.0
        %795 = vmatprep.subr.mxu0 0.0
        %796 = vmatpush1.msra.mxu0 0.0
        %797 = vmatprep.subr.mxu0 0.0
        %798 = vmatpush1.msra.mxu0 0.0
        %799 = vmatprep.subr.mxu0 0.0
        %800 = vmatpush1.msra.mxu0 0.0
        %801 = vmatprep.subr.mxu0 0.0
        %802 = vmatpush1.msra.mxu0 0.0
        %803 = vmatprep.subr.mxu0 0.0
        %804 = vmatpush1.msra.mxu0 0.0
        %805 = vmatprep.subr.mxu0 0.0
        %806 = vmatpush1.msra.mxu0 0.0
        %807 = vmatprep.subr.mxu0 0.0
        %808 = vmatpush1.msra.mxu0 0.0
        %809 = vmatprep.subr.mxu0 0.0
        %810 = vmatpush1.msra.mxu0 0.0
        %811 = vmatprep.subr.mxu0 0.0
        %812 = vmatpush1.msra.mxu0 0.0
        %813 = vmatprep.subr.mxu0 0.0
        %814 = vmatpush1.msra.mxu0 0.0
        %815 = vmatprep.subr.mxu0 0.0
        %816 = vmatpush1.msra.mxu0 0.0
        %817 = vmatprep.subr.mxu0 0.0
        %818 = vmatpush1.msra.mxu0 0.0
        %819 = vmatprep.subr.mxu0 0.0
        %820 = vmatpush1.msra.mxu0 0.0
        %821 = vmatprep.subr.mxu0 0.0
        %822 = vmatpush1.msra.mxu0 0.0
        %823 = vmatprep.subr.mxu0 0.0
        %824 = vmatpush1.msra.mxu0 0.0
        %825 = vmatprep.subr.mxu0 0.0
        %826 = vmatpush1.msra.mxu0 0.0
        %827 = vmatprep.subr.mxu0 0.0
        %828 = vmatpush1.msra.mxu0 0.0
        %829 = vmatprep.subr.mxu0 0.0
        %830 = vmatpush1.msra.mxu0 0.0
        %831 = vmatprep.subr.mxu0 0.0
        %832 = vmatpush1.msra.mxu0 0.0
        %833 = vmatprep.mubr.f32.mxu0 0.0
        %v834 = vand.u32 %v274, 4294901760
        %v835 = vsub.f32 %v274, %v834
        %v836 = vand.u32 %v835, 4294901760
        %v837 = vsub.f32 %v835, %v836
        %v838 = vand.u32 %v837, 4294901760
        %839 = vmatmul.mubr.f32.gmra.mrb[0].mxu0 %v838
        %v840 = vpop.f32.mrb[0].mxu0
        %v841 = vadd.f32 0.0, %v840
        %v842 = vpop.f32.mrb[0].mxu0
        %843 = vdwg.mxu0
        %844 = vmatprep.subr.mxu0 0.0
        %v845 = vand.u32 %v268, 4294901760
        %v846 = vsub.f32 %v268, %v845
        %v847 = vand.u32 %v846, 4294901760
        %v848 = vsub.f32 %v846, %v847
        %v849 = vand.u32 %v848, 4294901760
        %850 = vmatpush1.msra.mxu0 %v849
        %851 = vmatprep.subr.mxu0 0.0
        %v852 = vand.u32 %v271, 4294901760
        %v853 = vsub.f32 %v271, %v852
        %v854 = vand.u32 %v853, 4294901760
        %v855 = vsub.f32 %v853, %v854
        %v856 = vand.u32 %v855, 4294901760
        %857 = vmatpush1.msra.mxu0 %v856
        %858 = vmatprep.subr.mxu0 0.0
        %859 = vmatpush1.msra.mxu0 0.0
        %860 = vmatprep.subr.mxu0 0.0
        %861 = vmatpush1.msra.mxu0 0.0
        %862 = vmatprep.subr.mxu0 0.0
        %863 = vmatpush1.msra.mxu0 0.0
        %864 = vmatprep.subr.mxu0 0.0
        %865 = vmatpush1.msra.mxu0 0.0
        %866 = vmatprep.subr.mxu0 0.0
        %867 = vmatpush1.msra.mxu0 0.0
        %868 = vmatprep.subr.mxu0 0.0
        %869 = vmatpush1.msra.mxu0 0.0
        %870 = vmatprep.subr.mxu0 0.0
        %871 = vmatpush1.msra.mxu0 0.0
        %872 = vmatprep.subr.mxu0 0.0
        %873 = vmatpush1.msra.mxu0 0.0
        %874 = vmatprep.subr.mxu0 0.0
        %875 = vmatpush1.msra.mxu0 0.0
        %876 = vmatprep.subr.mxu0 0.0
        %877 = vmatpush1.msra.mxu0 0.0
        %878 = vmatprep.subr.mxu0 0.0
        %879 = vmatpush1.msra.mxu0 0.0
        %880 = vmatprep.subr.mxu0 0.0
        %881 = vmatpush1.msra.mxu0 0.0
        %882 = vmatprep.subr.mxu0 0.0
        %883 = vmatpush1.msra.mxu0 0.0
        %884 = vmatprep.subr.mxu0 0.0
        %885 = vmatpush1.msra.mxu0 0.0
        %886 = vmatprep.subr.mxu0 0.0
        %887 = vmatpush1.msra.mxu0 0.0
        %888 = vmatprep.subr.mxu0 0.0
        %889 = vmatpush1.msra.mxu0 0.0
        %890 = vmatprep.subr.mxu0 0.0
        %891 = vmatpush1.msra.mxu0 0.0
        %892 = vmatprep.subr.mxu0 0.0
        %893 = vmatpush1.msra.mxu0 0.0
        %894 = vmatprep.subr.mxu0 0.0
        %895 = vmatpush1.msra.mxu0 0.0
        %896 = vmatprep.subr.mxu0 0.0
        %897 = vmatpush1.msra.mxu0 0.0
        %898 = vmatprep.subr.mxu0 0.0
        %899 = vmatpush1.msra.mxu0 0.0
        %900 = vmatprep.subr.mxu0 0.0
        %901 = vmatpush1.msra.mxu0 0.0
        %902 = vmatprep.subr.mxu0 0.0
        %903 = vmatpush1.msra.mxu0 0.0
        %904 = vmatprep.subr.mxu0 0.0
        %905 = vmatpush1.msra.mxu0 0.0
        %906 = vmatprep.subr.mxu0 0.0
        %907 = vmatpush1.msra.mxu0 0.0
        %908 = vmatprep.subr.mxu0 0.0
        %909 = vmatpush1.msra.mxu0 0.0
        %910 = vmatprep.subr.mxu0 0.0
        %911 = vmatpush1.msra.mxu0 0.0
        %912 = vmatprep.subr.mxu0 0.0
        %913 = vmatpush1.msra.mxu0 0.0
        %914 = vmatprep.subr.mxu0 0.0
        %915 = vmatpush1.msra.mxu0 0.0
        %916 = vmatprep.subr.mxu0 0.0
        %917 = vmatpush1.msra.mxu0 0.0
        %918 = vmatprep.mubr.f32.mxu0 0.0
        %v919 = vand.u32 %v274, 4294901760
        %920 = vmatmul.mubr.f32.gmra.mrb[0].mxu0 %v919
        %v921 = vpop.f32.mrb[0].mxu0
        %v922 = vadd.f32 %v841, %v921
        %v923 = vpop.f32.mrb[0].mxu0
        %924 = vdwg.mxu0
        %925 = vmatprep.subr.mxu0 0.0
        %v926 = vand.u32 %v268, 4294901760
        %v927 = vsub.f32 %v268, %v926
        %928 = vmatpush1.msra.mxu0 %v927
        %929 = vmatprep.subr.mxu0 0.0
        %v930 = vand.u32 %v271, 4294901760
        %v931 = vsub.f32 %v271, %v930
        %932 = vmatpush1.msra.mxu0 %v931
        %933 = vmatprep.subr.mxu0 0.0
        %934 = vmatpush1.msra.mxu0 0.0
        %935 = vmatprep.subr.mxu0 0.0
        %936 = vmatpush1.msra.mxu0 0.0
        %937 = vmatprep.subr.mxu0 0.0
        %938 = vmatpush1.msra.mxu0 0.0
        %939 = vmatprep.subr.mxu0 0.0
        %940 = vmatpush1.msra.mxu0 0.0
        %941 = vmatprep.subr.mxu0 0.0
        %942 = vmatpush1.msra.mxu0 0.0
        %943 = vmatprep.subr.mxu0 0.0
        %944 = vmatpush1.msra.mxu0 0.0
        %945 = vmatprep.subr.mxu0 0.0
        %946 = vmatpush1.msra.mxu0 0.0
        %947 = vmatprep.subr.mxu0 0.0
        %948 = vmatpush1.msra.mxu0 0.0
        %949 = vmatprep.subr.mxu0 0.0
        %950 = vmatpush1.msra.mxu0 0.0
        %951 = vmatprep.subr.mxu0 0.0
        %952 = vmatpush1.msra.mxu0 0.0
        %953 = vmatprep.subr.mxu0 0.0
        %954 = vmatpush1.msra.mxu0 0.0
        %955 = vmatprep.subr.mxu0 0.0
        %956 = vmatpush1.msra.mxu0 0.0
        %957 = vmatprep.subr.mxu0 0.0
        %958 = vmatpush1.msra.mxu0 0.0
        %959 = vmatprep.subr.mxu0 0.0
        %960 = vmatpush1.msra.mxu0 0.0
        %961 = vmatprep.subr.mxu0 0.0
        %962 = vmatpush1.msra.mxu0 0.0
        %963 = vmatprep.subr.mxu0 0.0
        %964 = vmatpush1.msra.mxu0 0.0
        %965 = vmatprep.subr.mxu0 0.0
        %966 = vmatpush1.msra.mxu0 0.0
        %967 = vmatprep.subr.mxu0 0.0
        %968 = vmatpush1.msra.mxu0 0.0
        %969 = vmatprep.subr.mxu0 0.0
        %970 = vmatpush1.msra.mxu0 0.0
        %971 = vmatprep.subr.mxu0 0.0
        %972 = vmatpush1.msra.mxu0 0.0
        %973 = vmatprep.subr.mxu0 0.0
        %974 = vmatpush1.msra.mxu0 0.0
        %975 = vmatprep.subr.mxu0 0.0
        %976 = vmatpush1.msra.mxu0 0.0
        %977 = vmatprep.subr.mxu0 0.0
        %978 = vmatpush1.msra.mxu0 0.0
        %979 = vmatprep.subr.mxu0 0.0
        %980 = vmatpush1.msra.mxu0 0.0
        %981 = vmatprep.subr.mxu0 0.0
        %982 = vmatpush1.msra.mxu0 0.0
        %983 = vmatprep.subr.mxu0 0.0
        %984 = vmatpush1.msra.mxu0 0.0
        %985 = vmatprep.subr.mxu0 0.0
        %986 = vmatpush1.msra.mxu0 0.0
        %987 = vmatprep.subr.mxu0 0.0
        %988 = vmatpush1.msra.mxu0 0.0
        %989 = vmatprep.subr.mxu0 0.0
        %990 = vmatpush1.msra.mxu0 0.0
        %991 = vmatprep.subr.mxu0 0.0
        %992 = vmatpush1.msra.mxu0 0.0
        %993 = vmatprep.mubr.f32.mxu0 0.0
        %v994 = vand.u32 %v274, 4294901760
        %v995 = vsub.f32 %v274, %v994
        %996 = vmatmul.mubr.f32.gmra.mrb[0].mxu0 %v995
        %v997 = vpop.f32.mrb[0].mxu0
        %v998 = vadd.f32 %v922, %v997
        %v999 = vpop.f32.mrb[0].mxu0
        %1000 = vdwg.mxu0
        %1001 = vmatprep.subr.mxu0 0.0
        %v1002 = vand.u32 %v268, 4294901760
        %1003 = vmatpush1.msra.mxu0 %v1002
        %1004 = vmatprep.subr.mxu0 0.0
        %v1005 = vand.u32 %v271, 4294901760
        %1006 = vmatpush1.msra.mxu0 %v1005
        %1007 = vmatprep.subr.mxu0 0.0
        %1008 = vmatpush1.msra.mxu0 0.0
        %1009 = vmatprep.subr.mxu0 0.0
        %1010 = vmatpush1.msra.mxu0 0.0
        %1011 = vmatprep.subr.mxu0 0.0
        %1012 = vmatpush1.msra.mxu0 0.0
        %1013 = vmatprep.subr.mxu0 0.0
        %1014 = vmatpush1.msra.mxu0 0.0
        %1015 = vmatprep.subr.mxu0 0.0
        %1016 = vmatpush1.msra.mxu0 0.0
        %1017 = vmatprep.subr.mxu0 0.0
        %1018 = vmatpush1.msra.mxu0 0.0
        %1019 = vmatprep.subr.mxu0 0.0
        %1020 = vmatpush1.msra.mxu0 0.0
        %1021 = vmatprep.subr.mxu0 0.0
        %1022 = vmatpush1.msra.mxu0 0.0
        %1023 = vmatprep.subr.mxu0 0.0
        %1024 = vmatpush1.msra.mxu0 0.0
        %1025 = vmatprep.subr.mxu0 0.0
        %1026 = vmatpush1.msra.mxu0 0.0
        %1027 = vmatprep.subr.mxu0 0.0
        %1028 = vmatpush1.msra.mxu0 0.0
        %1029 = vmatprep.subr.mxu0 0.0
        %1030 = vmatpush1.msra.mxu0 0.0
        %1031 = vmatprep.subr.mxu0 0.0
        %1032 = vmatpush1.msra.mxu0 0.0
        %1033 = vmatprep.subr.mxu0 0.0
        %1034 = vmatpush1.msra.mxu0 0.0
        %1035 = vmatprep.subr.mxu0 0.0
        %1036 = vmatpush1.msra.mxu0 0.0
        %1037 = vmatprep.subr.mxu0 0.0
        %1038 = vmatpush1.msra.mxu0 0.0
        %1039 = vmatprep.subr.mxu0 0.0
        %1040 = vmatpush1.msra.mxu0 0.0
        %1041 = vmatprep.subr.mxu0 0.0
        %1042 = vmatpush1.msra.mxu0 0.0
        %1043 = vmatprep.subr.mxu0 0.0
        %1044 = vmatpush1.msra.mxu0 0.0
        %1045 = vmatprep.subr.mxu0 0.0
        %1046 = vmatpush1.msra.mxu0 0.0
        %1047 = vmatprep.subr.mxu0 0.0
        %1048 = vmatpush1.msra.mxu0 0.0
        %1049 = vmatprep.subr.mxu0 0.0
        %1050 = vmatpush1.msra.mxu0 0.0
        %1051 = vmatprep.subr.mxu0 0.0
        %1052 = vmatpush1.msra.mxu0 0.0
        %1053 = vmatprep.subr.mxu0 0.0
        %1054 = vmatpush1.msra.mxu0 0.0
        %1055 = vmatprep.subr.mxu0 0.0
        %1056 = vmatpush1.msra.mxu0 0.0
        %1057 = vmatprep.subr.mxu0 0.0
        %1058 = vmatpush1.msra.mxu0 0.0
        %1059 = vmatprep.subr.mxu0 0.0
        %1060 = vmatpush1.msra.mxu0 0.0
        %1061 = vmatprep.subr.mxu0 0.0
        %1062 = vmatpush1.msra.mxu0 0.0
        %1063 = vmatprep.subr.mxu0 0.0
        %1064 = vmatpush1.msra.mxu0 0.0
        %1065 = vmatprep.subr.mxu0 0.0
        %1066 = vmatpush1.msra.mxu0 0.0
        %1067 = vmatprep.mubr.f32.mxu0 0.0
        %v1068 = vand.u32 %v274, 4294901760
        %v1069 = vsub.f32 %v274, %v1068
        %v1070 = vand.u32 %v1069, 4294901760
        %1071 = vmatmul.mubr.f32.gmra.mrb[0].mxu0 %v1070
        %v1072 = vpop.f32.mrb[0].mxu0
        %v1073 = vadd.f32 %v998, %v1072
        %v1074 = vpop.f32.mrb[0].mxu0
        %1075 = vdwg.mxu0
        %1076 = vmatprep.subr.mxu0 0.0
        %v1077 = vand.u32 %v268, 4294901760
        %v1078 = vsub.f32 %v268, %v1077
        %v1079 = vand.u32 %v1078, 4294901760
        %1080 = vmatpush1.msra.mxu0 %v1079
        %1081 = vmatprep.subr.mxu0 0.0
        %v1082 = vand.u32 %v271, 4294901760
        %v1083 = vsub.f32 %v271, %v1082
        %v1084 = vand.u32 %v1083, 4294901760
        %1085 = vmatpush1.msra.mxu0 %v1084
        %1086 = vmatprep.subr.mxu0 0.0
        %1087 = vmatpush1.msra.mxu0 0.0
        %1088 = vmatprep.subr.mxu0 0.0
        %1089 = vmatpush1.msra.mxu0 0.0
        %1090 = vmatprep.subr.mxu0 0.0
        %1091 = vmatpush1.msra.mxu0 0.0
        %1092 = vmatprep.subr.mxu0 0.0
        %1093 = vmatpush1.msra.mxu0 0.0
        %1094 = vmatprep.subr.mxu0 0.0
        %1095 = vmatpush1.msra.mxu0 0.0
        %1096 = vmatprep.subr.mxu0 0.0
        %1097 = vmatpush1.msra.mxu0 0.0
        %1098 = vmatprep.subr.mxu0 0.0
        %1099 = vmatpush1.msra.mxu0 0.0
        %1100 = vmatprep.subr.mxu0 0.0
        %1101 = vmatpush1.msra.mxu0 0.0
        %1102 = vmatprep.subr.mxu0 0.0
        %1103 = vmatpush1.msra.mxu0 0.0
        %1104 = vmatprep.subr.mxu0 0.0
        %1105 = vmatpush1.msra.mxu0 0.0
        %1106 = vmatprep.subr.mxu0 0.0
        %1107 = vmatpush1.msra.mxu0 0.0
        %1108 = vmatprep.subr.mxu0 0.0
        %1109 = vmatpush1.msra.mxu0 0.0
        %1110 = vmatprep.subr.mxu0 0.0
        %1111 = vmatpush1.msra.mxu0 0.0
        %1112 = vmatprep.subr.mxu0 0.0
        %1113 = vmatpush1.msra.mxu0 0.0
        %1114 = vmatprep.subr.mxu0 0.0
        %1115 = vmatpush1.msra.mxu0 0.0
        %1116 = vmatprep.subr.mxu0 0.0
        %1117 = vmatpush1.msra.mxu0 0.0
        %1118 = vmatprep.subr.mxu0 0.0
        %1119 = vmatpush1.msra.mxu0 0.0
        %1120 = vmatprep.subr.mxu0 0.0
        %1121 = vmatpush1.msra.mxu0 0.0
        %1122 = vmatprep.subr.mxu0 0.0
        %1123 = vmatpush1.msra.mxu0 0.0
        %1124 = vmatprep.subr.mxu0 0.0
        %1125 = vmatpush1.msra.mxu0 0.0
        %1126 = vmatprep.subr.mxu0 0.0
        %1127 = vmatpush1.msra.mxu0 0.0
        %1128 = vmatprep.subr.mxu0 0.0
        %1129 = vmatpush1.msra.mxu0 0.0
        %1130 = vmatprep.subr.mxu0 0.0
        %1131 = vmatpush1.msra.mxu0 0.0
        %1132 = vmatprep.subr.mxu0 0.0
        %1133 = vmatpush1.msra.mxu0 0.0
        %1134 = vmatprep.subr.mxu0 0.0
        %1135 = vmatpush1.msra.mxu0 0.0
        %1136 = vmatprep.subr.mxu0 0.0
        %1137 = vmatpush1.msra.mxu0 0.0
        %1138 = vmatprep.subr.mxu0 0.0
        %1139 = vmatpush1.msra.mxu0 0.0
        %1140 = vmatprep.subr.mxu0 0.0
        %1141 = vmatpush1.msra.mxu0 0.0
        %1142 = vmatprep.subr.mxu0 0.0
        %1143 = vmatpush1.msra.mxu0 0.0
        %1144 = vmatprep.subr.mxu0 0.0
        %1145 = vmatpush1.msra.mxu0 0.0
        %1146 = vmatprep.mubr.f32.mxu0 0.0
        %v1147 = vand.u32 %v274, 4294901760
        %1148 = vmatmul.mubr.f32.gmra.mrb[0].mxu0 %v1147
        %v1149 = vpop.f32.mrb[0].mxu0
        %v1150 = vadd.f32 %v1073, %v1149
        %v1151 = vpop.f32.mrb[0].mxu0
        %1152 = vdwg.mxu0
        %1153 = vmatprep.subr.mxu0 0.0
        %v1154 = vand.u32 %v268, 4294901760
        %1155 = vmatpush1.msra.mxu0 %v1154
        %1156 = vmatprep.subr.mxu0 0.0
        %v1157 = vand.u32 %v271, 4294901760
        %1158 = vmatpush1.msra.mxu0 %v1157
        %1159 = vmatprep.subr.mxu0 0.0
        %1160 = vmatpush1.msra.mxu0 0.0
        %1161 = vmatprep.subr.mxu0 0.0
        %1162 = vmatpush1.msra.mxu0 0.0
        %1163 = vmatprep.subr.mxu0 0.0
        %1164 = vmatpush1.msra.mxu0 0.0
        %1165 = vmatprep.subr.mxu0 0.0
        %1166 = vmatpush1.msra.mxu0 0.0
        %1167 = vmatprep.subr.mxu0 0.0
        %1168 = vmatpush1.msra.mxu0 0.0
        %1169 = vmatprep.subr.mxu0 0.0
        %1170 = vmatpush1.msra.mxu0 0.0
        %1171 = vmatprep.subr.mxu0 0.0
        %1172 = vmatpush1.msra.mxu0 0.0
        %1173 = vmatprep.subr.mxu0 0.0
        %1174 = vmatpush1.msra.mxu0 0.0
        %1175 = vmatprep.subr.mxu0 0.0
        %1176 = vmatpush1.msra.mxu0 0.0
        %1177 = vmatprep.subr.mxu0 0.0
        %1178 = vmatpush1.msra.mxu0 0.0
        %1179 = vmatprep.subr.mxu0 0.0
        %1180 = vmatpush1.msra.mxu0 0.0
        %1181 = vmatprep.subr.mxu0 0.0
        %1182 = vmatpush1.msra.mxu0 0.0
        %1183 = vmatprep.subr.mxu0 0.0
        %1184 = vmatpush1.msra.mxu0 0.0
        %1185 = vmatprep.subr.mxu0 0.0
        %1186 = vmatpush1.msra.mxu0 0.0
        %1187 = vmatprep.subr.mxu0 0.0
        %1188 = vmatpush1.msra.mxu0 0.0
        %1189 = vmatprep.subr.mxu0 0.0
        %1190 = vmatpush1.msra.mxu0 0.0
        %1191 = vmatprep.subr.mxu0 0.0
        %1192 = vmatpush1.msra.mxu0 0.0
        %1193 = vmatprep.subr.mxu0 0.0
        %1194 = vmatpush1.msra.mxu0 0.0
        %1195 = vmatprep.subr.mxu0 0.0
        %1196 = vmatpush1.msra.mxu0 0.0
        %1197 = vmatprep.subr.mxu0 0.0
        %1198 = vmatpush1.msra.mxu0 0.0
        %1199 = vmatprep.subr.mxu0 0.0
        %1200 = vmatpush1.msra.mxu0 0.0
        %1201 = vmatprep.subr.mxu0 0.0
        %1202 = vmatpush1.msra.mxu0 0.0
        %1203 = vmatprep.subr.mxu0 0.0
        %1204 = vmatpush1.msra.mxu0 0.0
        %1205 = vmatprep.subr.mxu0 0.0
        %1206 = vmatpush1.msra.mxu0 0.0
        %1207 = vmatprep.subr.mxu0 0.0
        %1208 = vmatpush1.msra.mxu0 0.0
        %1209 = vmatprep.subr.mxu0 0.0
        %1210 = vmatpush1.msra.mxu0 0.0
        %1211 = vmatprep.subr.mxu0 0.0
        %1212 = vmatpush1.msra.mxu0 0.0
        %1213 = vmatprep.subr.mxu0 0.0
        %1214 = vmatpush1.msra.mxu0 0.0
        %1215 = vmatprep.subr.mxu0 0.0
        %1216 = vmatpush1.msra.mxu0 0.0
        %1217 = vmatprep.subr.mxu0 0.0
        %1218 = vmatpush1.msra.mxu0 0.0
        %1219 = vmatprep.mubr.f32.mxu0 0.0
        %v1220 = vand.u32 %v274, 4294901760
        %1221 = vmatmul.mubr.f32.gmra.mrb[0].mxu0 %v1220
        %v1222 = vpop.f32.mrb[0].mxu0
        %v1223 = vadd.f32 %v1150, %v1222
        %v1224 = vpop.f32.mrb[0].mxu0
        %1225 = vdwg.mxu0
        %1227 = vrot.lane.b32.xlu0 %v1223, 127
        %v1228 = vpop.permute.xlu0 %1227
        %1230 = vxpose.xlu0.b32.start [1/16] %v1228, 128
        %1231 = vxpose.xlu0.b32.cont [2/16] 0.0, 128
        %1232 = vxpose.xlu0.b32.cont [3/16] 0.0, 128
        %1233 = vxpose.xlu0.b32.cont [4/16] 0.0, 128
        %1234 = vxpose.xlu0.b32.cont [5/16] 0.0, 128
        %1235 = vxpose.xlu0.b32.cont [6/16] 0.0, 128
        %1236 = vxpose.xlu0.b32.cont [7/16] 0.0, 128
        %1237 = vxpose.xlu0.b32.cont [8/16] 0.0, 128
        %1238 = vxpose.xlu0.b32.cont [9/16] 0.0, 128
        %1239 = vxpose.xlu0.b32.cont [10/16] 0.0, 128
        %1240 = vxpose.xlu0.b32.cont [11/16] 0.0, 128
        %1241 = vxpose.xlu0.b32.cont [12/16] 0.0, 128
        %1242 = vxpose.xlu0.b32.cont [13/16] 0.0, 128
        %1243 = vxpose.xlu0.b32.cont [14/16] 0.0, 128
        %1244 = vxpose.xlu0.b32.cont [15/16] 0.0, 128
        %1245 = vxpose.xlu0.b32.end [16/16] 0.0, 128
        %v1246 = vpop.trf.xlu0
        %v1247 = vpop.trf.xlu0
        %v1248 = vpop.trf.xlu0
        %v1249 = vpop.trf.xlu0
        %v1250 = vpop.trf.xlu0
        %v1251 = vpop.trf.xlu0
        %v1252 = vpop.trf.xlu0
        %v1253 = vpop.trf.xlu0
        %v1254 = vpop.trf.xlu0
        %v1255 = vpop.trf.xlu0
        %v1256 = vpop.trf.xlu0
        %v1257 = vpop.trf.xlu0
        %v1258 = vpop.trf.xlu0
        %v1259 = vpop.trf.xlu0
        %v1260 = vpop.trf.xlu0
        %v1261 = vpop.trf.xlu0
        %1262 = vset.pattern.permute.xlu0 0
        %1263 = vperm.xlu0 %1262, %v1223
        %v1264 = vpop.permute.xlu0 %1263
        %v1266 = vlaneseq
        %v1267 = vshrl.u32 %v1266, 7
        %v1268 = vsub.s32 0, %v1267
        %v1269 = vrot.slane %v1246, %v1268
        %v1270 = vadd.f32 %v1264, %v1269
        %vm1271 = vcmp.gt.f32.partialorder %v1270, 0.0
        %v1272 = vmul.f32 %v1270, 0.2
        %v1273 = vsel %vm1271, %v1270, %v1272
        %vm1274 = vcmp.gt.f32.partialorder %v265, 0.0
        %v1275 = vsel %vm1274, %v1273, -9e+15
        %vm1276 = vcmask 64512
        %v1277 = vsel %vm1276, %v1275, -inf
        %1278 = vmax.xlane.f32.xlu0 %v1277
        %v1279 = vpop.xlane.xlu0 %1278
        %v1280 = vsub.f32 %v1275, %v1279
        %v1281 = vmul.f32 %v1280, 1.442695
        %v1282 = vpow.pop %v1281
        %v1283 = vsel %vm1276, %v1282, 0.0
        %1284 = vadd.xlane.f32.xlu0 %v1283
        %v1285 = vpop.xlane.xlu0 %1284
        %v1286 = vrcp.pop %v1285
        %v1287 = vmul.f32 %v1282, %v1286
        %v1289 = vsel %vm1276, %v265, 0
        %1291 = vmatprep.subr.mxu0 0.0
        %v1292 = vand.u32 %v765, 4294901760
        %1293 = vmatpush1.msra.mxu0 %v1292
        %1294 = vmatprep.subr.mxu0 0.0
        %1295 = vmatpush1.msra.mxu0 0.0
        %1296 = vmatprep.subr.mxu0 0.0
        %1297 = vmatpush1.msra.mxu0 0.0
        %1298 = vmatprep.subr.mxu0 0.0
        %1299 = vmatpush1.msra.mxu0 0.0
        %1300 = vmatprep.subr.mxu0 0.0
        %1301 = vmatpush1.msra.mxu0 0.0
        %1302 = vmatprep.subr.mxu0 0.0
        %1303 = vmatpush1.msra.mxu0 0.0
        %1304 = vmatprep.subr.mxu0 0.0
        %1305 = vmatpush1.msra.mxu0 0.0
        %1306 = vmatprep.subr.mxu0 0.0
        %1307 = vmatpush1.msra.mxu0 0.0
        %1308 = vmatprep.subr.mxu0 0.0
        %1309 = vmatpush1.msra.mxu0 0.0
        %1310 = vmatprep.subr.mxu0 0.0
        %1311 = vmatpush1.msra.mxu0 0.0
        %1312 = vmatprep.subr.mxu0 0.0
        %1313 = vmatpush1.msra.mxu0 0.0
        %1314 = vmatprep.subr.mxu0 0.0
        %1315 = vmatpush1.msra.mxu0 0.0
        %1316 = vmatprep.subr.mxu0 0.0
        %1317 = vmatpush1.msra.mxu0 0.0
        %1318 = vmatprep.subr.mxu0 0.0
        %1319 = vmatpush1.msra.mxu0 0.0
        %1320 = vmatprep.subr.mxu0 0.0
        %1321 = vmatpush1.msra.mxu0 0.0
        %1322 = vmatprep.subr.mxu0 0.0
        %1323 = vmatpush1.msra.mxu0 0.0
        %1324 = vmatprep.subr.mxu0 0.0
        %1325 = vmatpush1.msra.mxu0 0.0
        %1326 = vmatprep.subr.mxu0 0.0
        %1327 = vmatpush1.msra.mxu0 0.0
        %1328 = vmatprep.subr.mxu0 0.0
        %1329 = vmatpush1.msra.mxu0 0.0
        %1330 = vmatprep.subr.mxu0 0.0
        %1331 = vmatpush1.msra.mxu0 0.0
        %1332 = vmatprep.subr.mxu0 0.0
        %1333 = vmatpush1.msra.mxu0 0.0
        %1334 = vmatprep.subr.mxu0 0.0
        %1335 = vmatpush1.msra.mxu0 0.0
        %1336 = vmatprep.subr.mxu0 0.0
        %1337 = vmatpush1.msra.mxu0 0.0
        %1338 = vmatprep.subr.mxu0 0.0
        %1339 = vmatpush1.msra.mxu0 0.0
        %1340 = vmatprep.subr.mxu0 0.0
        %1341 = vmatpush1.msra.mxu0 0.0
        %1342 = vmatprep.subr.mxu0 0.0
        %1343 = vmatpush1.msra.mxu0 0.0
        %1344 = vmatprep.subr.mxu0 0.0
        %1345 = vmatpush1.msra.mxu0 0.0
        %1346 = vmatprep.subr.mxu0 0.0
        %1347 = vmatpush1.msra.mxu0 0.0
        %1348 = vmatprep.subr.mxu0 0.0
        %1349 = vmatpush1.msra.mxu0 0.0
        %1350 = vmatprep.subr.mxu0 0.0
        %1351 = vmatpush1.msra.mxu0 0.0
        %1352 = vmatprep.subr.mxu0 0.0
        %1353 = vmatpush1.msra.mxu0 0.0
        %1354 = vmatprep.subr.mxu0 0.0
        %1355 = vmatpush1.msra.mxu0 0.0
        %1356 = vmatprep.mubr.f32.mxu0 0.0
        %v1357 = vand.u32 %v1289, 4294901760
        %v1358 = vsub.f32 %v1289, %v1357
        %v1359 = vand.u32 %v1358, 4294901760
        %v1360 = vsub.f32 %v1358, %v1359
        %v1361 = vand.u32 %v1360, 4294901760
        %1362 = vmatmul.mubr.f32.gmra.mrb[0].mxu0 %v1361
        %v1363 = vpop.f32.mrb[0].mxu0
        %v1364 = vadd.f32 0.0, %v1363
        %v1365 = vpop.f32.mrb[0].mxu0
        %1366 = vdwg.mxu0
        %1367 = vmatprep.subr.mxu0 0.0
        %v1368 = vand.u32 %v765, 4294901760
        %v1369 = vsub.f32 %v765, %v1368
        %v1370 = vand.u32 %v1369, 4294901760
        %v1371 = vsub.f32 %v1369, %v1370
        %v1372 = vand.u32 %v1371, 4294901760
        %1373 = vmatpush1.msra.mxu0 %v1372
        %1374 = vmatprep.subr.mxu0 0.0
        %1375 = vmatpush1.msra.mxu0 0.0
        %1376 = vmatprep.subr.mxu0 0.0
        %1377 = vmatpush1.msra.mxu0 0.0
        %1378 = vmatprep.subr.mxu0 0.0
        %1379 = vmatpush1.msra.mxu0 0.0
        %1380 = vmatprep.subr.mxu0 0.0
        %1381 = vmatpush1.msra.mxu0 0.0
        %1382 = vmatprep.subr.mxu0 0.0
        %1383 = vmatpush1.msra.mxu0 0.0
        %1384 = vmatprep.subr.mxu0 0.0
        %1385 = vmatpush1.msra.mxu0 0.0
        %1386 = vmatprep.subr.mxu0 0.0
        %1387 = vmatpush1.msra.mxu0 0.0
        %1388 = vmatprep.subr.mxu0 0.0
        %1389 = vmatpush1.msra.mxu0 0.0
        %1390 = vmatprep.subr.mxu0 0.0
        %1391 = vmatpush1.msra.mxu0 0.0
        %1392 = vmatprep.subr.mxu0 0.0
        %1393 = vmatpush1.msra.mxu0 0.0
        %1394 = vmatprep.subr.mxu0 0.0
        %1395 = vmatpush1.msra.mxu0 0.0
        %1396 = vmatprep.subr.mxu0 0.0
        %1397 = vmatpush1.msra.mxu0 0.0
        %1398 = vmatprep.subr.mxu0 0.0
        %1399 = vmatpush1.msra.mxu0 0.0
        %1400 = vmatprep.subr.mxu0 0.0
        %1401 = vmatpush1.msra.mxu0 0.0
        %1402 = vmatprep.subr.mxu0 0.0
        %1403 = vmatpush1.msra.mxu0 0.0
        %1404 = vmatprep.subr.mxu0 0.0
        %1405 = vmatpush1.msra.mxu0 0.0
        %1406 = vmatprep.subr.mxu0 0.0
        %1407 = vmatpush1.msra.mxu0 0.0
        %1408 = vmatprep.subr.mxu0 0.0
        %1409 = vmatpush1.msra.mxu0 0.0
        %1410 = vmatprep.subr.mxu0 0.0
        %1411 = vmatpush1.msra.mxu0 0.0
        %1412 = vmatprep.subr.mxu0 0.0
        %1413 = vmatpush1.msra.mxu0 0.0
        %1414 = vmatprep.subr.mxu0 0.0
        %1415 = vmatpush1.msra.mxu0 0.0
        %1416 = vmatprep.subr.mxu0 0.0
        %1417 = vmatpush1.msra.mxu0 0.0
        %1418 = vmatprep.subr.mxu0 0.0
        %1419 = vmatpush1.msra.mxu0 0.0
        %1420 = vmatprep.subr.mxu0 0.0
        %1421 = vmatpush1.msra.mxu0 0.0
        %1422 = vmatprep.subr.mxu0 0.0
        %1423 = vmatpush1.msra.mxu0 0.0
        %1424 = vmatprep.subr.mxu0 0.0
        %1425 = vmatpush1.msra.mxu0 0.0
        %1426 = vmatprep.subr.mxu0 0.0
        %1427 = vmatpush1.msra.mxu0 0.0
        %1428 = vmatprep.subr.mxu0 0.0
        %1429 = vmatpush1.msra.mxu0 0.0
        %1430 = vmatprep.subr.mxu0 0.0
        %1431 = vmatpush1.msra.mxu0 0.0
        %1432 = vmatprep.subr.mxu0 0.0
        %1433 = vmatpush1.msra.mxu0 0.0
        %1434 = vmatprep.subr.mxu0 0.0
        %1435 = vmatpush1.msra.mxu0 0.0
        %1436 = vmatprep.mubr.f32.mxu0 0.0
        %v1437 = vand.u32 %v1289, 4294901760
        %1438 = vmatmul.mubr.f32.gmra.mrb[0].mxu0 %v1437
        %v1439 = vpop.f32.mrb[0].mxu0
        %v1440 = vadd.f32 %v1364, %v1439
        %v1441 = vpop.f32.mrb[0].mxu0
        %1442 = vdwg.mxu0
        %1443 = vmatprep.subr.mxu0 0.0
        %v1444 = vand.u32 %v765, 4294901760
        %v1445 = vsub.f32 %v765, %v1444
        %1446 = vmatpush1.msra.mxu0 %v1445
        %1447 = vmatprep.subr.mxu0 0.0
        %1448 = vmatpush1.msra.mxu0 0.0
        %1449 = vmatprep.subr.mxu0 0.0
        %1450 = vmatpush1.msra.mxu0 0.0
        %1451 = vmatprep.subr.mxu0 0.0
        %1452 = vmatpush1.msra.mxu0 0.0
        %1453 = vmatprep.subr.mxu0 0.0
        %1454 = vmatpush1.msra.mxu0 0.0
        %1455 = vmatprep.subr.mxu0 0.0
        %1456 = vmatpush1.msra.mxu0 0.0
        %1457 = vmatprep.subr.mxu0 0.0
        %1458 = vmatpush1.msra.mxu0 0.0
        %1459 = vmatprep.subr.mxu0 0.0
        %1460 = vmatpush1.msra.mxu0 0.0
        %1461 = vmatprep.subr.mxu0 0.0
        %1462 = vmatpush1.msra.mxu0 0.0
        %1463 = vmatprep.subr.mxu0 0.0
        %1464 = vmatpush1.msra.mxu0 0.0
        %1465 = vmatprep.subr.mxu0 0.0
        %1466 = vmatpush1.msra.mxu0 0.0
        %1467 = vmatprep.subr.mxu0 0.0
        %1468 = vmatpush1.msra.mxu0 0.0
        %1469 = vmatprep.subr.mxu0 0.0
        %1470 = vmatpush1.msra.mxu0 0.0
        %1471 = vmatprep.subr.mxu0 0.0
        %1472 = vmatpush1.msra.mxu0 0.0
        %1473 = vmatprep.subr.mxu0 0.0
        %1474 = vmatpush1.msra.mxu0 0.0
        %1475 = vmatprep.subr.mxu0 0.0
        %1476 = vmatpush1.msra.mxu0 0.0
        %1477 = vmatprep.subr.mxu0 0.0
        %1478 = vmatpush1.msra.mxu0 0.0
        %1479 = vmatprep.subr.mxu0 0.0
        %1480 = vmatpush1.msra.mxu0 0.0
        %1481 = vmatprep.subr.mxu0 0.0
        %1482 = vmatpush1.msra.mxu0 0.0
        %1483 = vmatprep.subr.mxu0 0.0
        %1484 = vmatpush1.msra.mxu0 0.0
        %1485 = vmatprep.subr.mxu0 0.0
        %1486 = vmatpush1.msra.mxu0 0.0
        %1487 = vmatprep.subr.mxu0 0.0
        %1488 = vmatpush1.msra.mxu0 0.0
        %1489 = vmatprep.subr.mxu0 0.0
        %1490 = vmatpush1.msra.mxu0 0.0
        %1491 = vmatprep.subr.mxu0 0.0
        %1492 = vmatpush1.msra.mxu0 0.0
        %1493 = vmatprep.subr.mxu0 0.0
        %1494 = vmatpush1.msra.mxu0 0.0
        %1495 = vmatprep.subr.mxu0 0.0
        %1496 = vmatpush1.msra.mxu0 0.0
        %1497 = vmatprep.subr.mxu0 0.0
        %1498 = vmatpush1.msra.mxu0 0.0
        %1499 = vmatprep.subr.mxu0 0.0
        %1500 = vmatpush1.msra.mxu0 0.0
        %1501 = vmatprep.subr.mxu0 0.0
        %1502 = vmatpush1.msra.mxu0 0.0
        %1503 = vmatprep.subr.mxu0 0.0
        %1504 = vmatpush1.msra.mxu0 0.0
        %1505 = vmatprep.subr.mxu0 0.0
        %1506 = vmatpush1.msra.mxu0 0.0
        %1507 = vmatprep.subr.mxu0 0.0
        %1508 = vmatpush1.msra.mxu0 0.0
        %1509 = vmatprep.mubr.f32.mxu0 0.0
        %v1510 = vand.u32 %v1289, 4294901760
        %v1511 = vsub.f32 %v1289, %v1510
        %1512 = vmatmul.mubr.f32.gmra.mrb[0].mxu0 %v1511
        %v1513 = vpop.f32.mrb[0].mxu0
        %v1514 = vadd.f32 %v1440, %v1513
        %v1515 = vpop.f32.mrb[0].mxu0
        %1516 = vdwg.mxu0
        %1517 = vmatprep.subr.mxu0 0.0
        %v1518 = vand.u32 %v765, 4294901760
        %1519 = vmatpush1.msra.mxu0 %v1518
        %1520 = vmatprep.subr.mxu0 0.0
        %1521 = vmatpush1.msra.mxu0 0.0
        %1522 = vmatprep.subr.mxu0 0.0
        %1523 = vmatpush1.msra.mxu0 0.0
        %1524 = vmatprep.subr.mxu0 0.0
        %1525 = vmatpush1.msra.mxu0 0.0
        %1526 = vmatprep.subr.mxu0 0.0
        %1527 = vmatpush1.msra.mxu0 0.0
        %1528 = vmatprep.subr.mxu0 0.0
        %1529 = vmatpush1.msra.mxu0 0.0
        %1530 = vmatprep.subr.mxu0 0.0
        %1531 = vmatpush1.msra.mxu0 0.0
        %1532 = vmatprep.subr.mxu0 0.0
        %1533 = vmatpush1.msra.mxu0 0.0
        %1534 = vmatprep.subr.mxu0 0.0
        %1535 = vmatpush1.msra.mxu0 0.0
        %1536 = vmatprep.subr.mxu0 0.0
        %1537 = vmatpush1.msra.mxu0 0.0
        %1538 = vmatprep.subr.mxu0 0.0
        %1539 = vmatpush1.msra.mxu0 0.0
        %1540 = vmatprep.subr.mxu0 0.0
        %1541 = vmatpush1.msra.mxu0 0.0
        %1542 = vmatprep.subr.mxu0 0.0
        %1543 = vmatpush1.msra.mxu0 0.0
        %1544 = vmatprep.subr.mxu0 0.0
        %1545 = vmatpush1.msra.mxu0 0.0
        %1546 = vmatprep.subr.mxu0 0.0
        %1547 = vmatpush1.msra.mxu0 0.0
        %1548 = vmatprep.subr.mxu0 0.0
        %1549 = vmatpush1.msra.mxu0 0.0
        %1550 = vmatprep.subr.mxu0 0.0
        %1551 = vmatpush1.msra.mxu0 0.0
        %1552 = vmatprep.subr.mxu0 0.0
        %1553 = vmatpush1.msra.mxu0 0.0
        %1554 = vmatprep.subr.mxu0 0.0
        %1555 = vmatpush1.msra.mxu0 0.0
        %1556 = vmatprep.subr.mxu0 0.0
        %1557 = vmatpush1.msra.mxu0 0.0
        %1558 = vmatprep.subr.mxu0 0.0
        %1559 = vmatpush1.msra.mxu0 0.0
        %1560 = vmatprep.subr.mxu0 0.0
        %1561 = vmatpush1.msra.mxu0 0.0
        %1562 = vmatprep.subr.mxu0 0.0
        %1563 = vmatpush1.msra.mxu0 0.0
        %1564 = vmatprep.subr.mxu0 0.0
        %1565 = vmatpush1.msra.mxu0 0.0
        %1566 = vmatprep.subr.mxu0 0.0
        %1567 = vmatpush1.msra.mxu0 0.0
        %1568 = vmatprep.subr.mxu0 0.0
        %1569 = vmatpush1.msra.mxu0 0.0
        %1570 = vmatprep.subr.mxu0 0.0
        %1571 = vmatpush1.msra.mxu0 0.0
        %1572 = vmatprep.subr.mxu0 0.0
        %1573 = vmatpush1.msra.mxu0 0.0
        %1574 = vmatprep.subr.mxu0 0.0
        %1575 = vmatpush1.msra.mxu0 0.0
        %1576 = vmatprep.subr.mxu0 0.0
        %1577 = vmatpush1.msra.mxu0 0.0
        %1578 = vmatprep.subr.mxu0 0.0
        %1579 = vmatpush1.msra.mxu0 0.0
        %1580 = vmatprep.subr.mxu0 0.0
        %1581 = vmatpush1.msra.mxu0 0.0
        %1582 = vmatprep.mubr.f32.mxu0 0.0
        %v1583 = vand.u32 %v1289, 4294901760
        %v1584 = vsub.f32 %v1289, %v1583
        %v1585 = vand.u32 %v1584, 4294901760
        %1586 = vmatmul.mubr.f32.gmra.mrb[0].mxu0 %v1585
        %v1587 = vpop.f32.mrb[0].mxu0
        %v1588 = vadd.f32 %v1514, %v1587
        %v1589 = vpop.f32.mrb[0].mxu0
        %1590 = vdwg.mxu0
        %1591 = vmatprep.subr.mxu0 0.0
        %v1592 = vand.u32 %v765, 4294901760
        %v1593 = vsub.f32 %v765, %v1592
        %v1594 = vand.u32 %v1593, 4294901760
        %1595 = vmatpush1.msra.mxu0 %v1594
        %1596 = vmatprep.subr.mxu0 0.0
        %1597 = vmatpush1.msra.mxu0 0.0
        %1598 = vmatprep.subr.mxu0 0.0
        %1599 = vmatpush1.msra.mxu0 0.0
        %1600 = vmatprep.subr.mxu0 0.0
        %1601 = vmatpush1.msra.mxu0 0.0
        %1602 = vmatprep.subr.mxu0 0.0
        %1603 = vmatpush1.msra.mxu0 0.0
        %1604 = vmatprep.subr.mxu0 0.0
        %1605 = vmatpush1.msra.mxu0 0.0
        %1606 = vmatprep.subr.mxu0 0.0
        %1607 = vmatpush1.msra.mxu0 0.0
        %1608 = vmatprep.subr.mxu0 0.0
        %1609 = vmatpush1.msra.mxu0 0.0
        %1610 = vmatprep.subr.mxu0 0.0
        %1611 = vmatpush1.msra.mxu0 0.0
        %1612 = vmatprep.subr.mxu0 0.0
        %1613 = vmatpush1.msra.mxu0 0.0
        %1614 = vmatprep.subr.mxu0 0.0
        %1615 = vmatpush1.msra.mxu0 0.0
        %1616 = vmatprep.subr.mxu0 0.0
        %1617 = vmatpush1.msra.mxu0 0.0
        %1618 = vmatprep.subr.mxu0 0.0
        %1619 = vmatpush1.msra.mxu0 0.0
        %1620 = vmatprep.subr.mxu0 0.0
        %1621 = vmatpush1.msra.mxu0 0.0
        %1622 = vmatprep.subr.mxu0 0.0
        %1623 = vmatpush1.msra.mxu0 0.0
        %1624 = vmatprep.subr.mxu0 0.0
        %1625 = vmatpush1.msra.mxu0 0.0
        %1626 = vmatprep.subr.mxu0 0.0
        %1627 = vmatpush1.msra.mxu0 0.0
        %1628 = vmatprep.subr.mxu0 0.0
        %1629 = vmatpush1.msra.mxu0 0.0
        %1630 = vmatprep.subr.mxu0 0.0
        %1631 = vmatpush1.msra.mxu0 0.0
        %1632 = vmatprep.subr.mxu0 0.0
        %1633 = vmatpush1.msra.mxu0 0.0
        %1634 = vmatprep.subr.mxu0 0.0
        %1635 = vmatpush1.msra.mxu0 0.0
        %1636 = vmatprep.subr.mxu0 0.0
        %1637 = vmatpush1.msra.mxu0 0.0
        %1638 = vmatprep.subr.mxu0 0.0
        %1639 = vmatpush1.msra.mxu0 0.0
        %1640 = vmatprep.subr.mxu0 0.0
        %1641 = vmatpush1.msra.mxu0 0.0
        %1642 = vmatprep.subr.mxu0 0.0
        %1643 = vmatpush1.msra.mxu0 0.0
        %1644 = vmatprep.subr.mxu0 0.0
        %1645 = vmatpush1.msra.mxu0 0.0
        %1646 = vmatprep.subr.mxu0 0.0
        %1647 = vmatpush1.msra.mxu0 0.0
        %1648 = vmatprep.subr.mxu0 0.0
        %1649 = vmatpush1.msra.mxu0 0.0
        %1650 = vmatprep.subr.mxu0 0.0
        %1651 = vmatpush1.msra.mxu0 0.0
        %1652 = vmatprep.subr.mxu0 0.0
        %1653 = vmatpush1.msra.mxu0 0.0
        %1654 = vmatprep.subr.mxu0 0.0
        %1655 = vmatpush1.msra.mxu0 0.0
        %1656 = vmatprep.subr.mxu0 0.0
        %1657 = vmatpush1.msra.mxu0 0.0
        %1658 = vmatprep.mubr.f32.mxu0 0.0
        %v1659 = vand.u32 %v1289, 4294901760
        %1660 = vmatmul.mubr.f32.gmra.mrb[0].mxu0 %v1659
        %v1661 = vpop.f32.mrb[0].mxu0
        %v1662 = vadd.f32 %v1588, %v1661
        %v1663 = vpop.f32.mrb[0].mxu0
        %1664 = vdwg.mxu0
        %1665 = vmatprep.subr.mxu0 0.0
        %v1666 = vand.u32 %v765, 4294901760
        %1667 = vmatpush1.msra.mxu0 %v1666
        %1668 = vmatprep.subr.mxu0 0.0
        %1669 = vmatpush1.msra.mxu0 0.0
        %1670 = vmatprep.subr.mxu0 0.0
        %1671 = vmatpush1.msra.mxu0 0.0
        %1672 = vmatprep.subr.mxu0 0.0
        %1673 = vmatpush1.msra.mxu0 0.0
        %1674 = vmatprep.subr.mxu0 0.0
        %1675 = vmatpush1.msra.mxu0 0.0
        %1676 = vmatprep.subr.mxu0 0.0
        %1677 = vmatpush1.msra.mxu0 0.0
        %1678 = vmatprep.subr.mxu0 0.0
        %1679 = vmatpush1.msra.mxu0 0.0
        %1680 = vmatprep.subr.mxu0 0.0
        %1681 = vmatpush1.msra.mxu0 0.0
        %1682 = vmatprep.subr.mxu0 0.0
        %1683 = vmatpush1.msra.mxu0 0.0
        %1684 = vmatprep.subr.mxu0 0.0
        %1685 = vmatpush1.msra.mxu0 0.0
        %1686 = vmatprep.subr.mxu0 0.0
        %1687 = vmatpush1.msra.mxu0 0.0
        %1688 = vmatprep.subr.mxu0 0.0
        %1689 = vmatpush1.msra.mxu0 0.0
        %1690 = vmatprep.subr.mxu0 0.0
        %1691 = vmatpush1.msra.mxu0 0.0
        %1692 = vmatprep.subr.mxu0 0.0
        %1693 = vmatpush1.msra.mxu0 0.0
        %1694 = vmatprep.subr.mxu0 0.0
        %1695 = vmatpush1.msra.mxu0 0.0
        %1696 = vmatprep.subr.mxu0 0.0
        %1697 = vmatpush1.msra.mxu0 0.0
        %1698 = vmatprep.subr.mxu0 0.0
        %1699 = vmatpush1.msra.mxu0 0.0
        %1700 = vmatprep.subr.mxu0 0.0
        %1701 = vmatpush1.msra.mxu0 0.0
        %1702 = vmatprep.subr.mxu0 0.0
        %1703 = vmatpush1.msra.mxu0 0.0
        %1704 = vmatprep.subr.mxu0 0.0
        %1705 = vmatpush1.msra.mxu0 0.0
        %1706 = vmatprep.subr.mxu0 0.0
        %1707 = vmatpush1.msra.mxu0 0.0
        %1708 = vmatprep.subr.mxu0 0.0
        %1709 = vmatpush1.msra.mxu0 0.0
        %1710 = vmatprep.subr.mxu0 0.0
        %1711 = vmatpush1.msra.mxu0 0.0
        %1712 = vmatprep.subr.mxu0 0.0
        %1713 = vmatpush1.msra.mxu0 0.0
        %1714 = vmatprep.subr.mxu0 0.0
        %1715 = vmatpush1.msra.mxu0 0.0
        %1716 = vmatprep.subr.mxu0 0.0
        %1717 = vmatpush1.msra.mxu0 0.0
        %1718 = vmatprep.subr.mxu0 0.0
        %1719 = vmatpush1.msra.mxu0 0.0
        %1720 = vmatprep.subr.mxu0 0.0
        %1721 = vmatpush1.msra.mxu0 0.0
        %1722 = vmatprep.subr.mxu0 0.0
        %1723 = vmatpush1.msra.mxu0 0.0
        %1724 = vmatprep.subr.mxu0 0.0
        %1725 = vmatpush1.msra.mxu0 0.0
        %1726 = vmatprep.subr.mxu0 0.0
        %1727 = vmatpush1.msra.mxu0 0.0
        %1728 = vmatprep.subr.mxu0 0.0
        %1729 = vmatpush1.msra.mxu0 0.0
        %1730 = vmatprep.mubr.f32.mxu0 0.0
        %v1731 = vand.u32 %v1289, 4294901760
        %1732 = vmatmul.mubr.f32.gmra.mrb[0].mxu0 %v1731
        %v1733 = vpop.f32.mrb[0].mxu0
        %v1734 = vadd.f32 %v1662, %v1733
        %v1735 = vpop.f32.mrb[0].mxu0
        %1736 = vdwg.mxu0
        %v1738 = vsel %vm1276, %v1287, 0
        %1740 = vmatprep.subr.mxu0 0.0
        %v1741 = vand.u32 %v763, 4294901760
        %1742 = vmatpush1.msra.mxu0 %v1741
        %1743 = vmatprep.subr.mxu0 0.0
        %1744 = vmatpush1.msra.mxu0 0.0
        %1745 = vmatprep.subr.mxu0 0.0
        %1746 = vmatpush1.msra.mxu0 0.0
        %1747 = vmatprep.subr.mxu0 0.0
        %1748 = vmatpush1.msra.mxu0 0.0
        %1749 = vmatprep.subr.mxu0 0.0
        %1750 = vmatpush1.msra.mxu0 0.0
        %1751 = vmatprep.subr.mxu0 0.0
        %1752 = vmatpush1.msra.mxu0 0.0
        %1753 = vmatprep.subr.mxu0 0.0
        %1754 = vmatpush1.msra.mxu0 0.0
        %1755 = vmatprep.subr.mxu0 0.0
        %1756 = vmatpush1.msra.mxu0 0.0
        %1757 = vmatprep.subr.mxu0 0.0
        %1758 = vmatpush1.msra.mxu0 0.0
        %1759 = vmatprep.subr.mxu0 0.0
        %1760 = vmatpush1.msra.mxu0 0.0
        %1761 = vmatprep.subr.mxu0 0.0
        %1762 = vmatpush1.msra.mxu0 0.0
        %1763 = vmatprep.subr.mxu0 0.0
        %1764 = vmatpush1.msra.mxu0 0.0
        %1765 = vmatprep.subr.mxu0 0.0
        %1766 = vmatpush1.msra.mxu0 0.0
        %1767 = vmatprep.subr.mxu0 0.0
        %1768 = vmatpush1.msra.mxu0 0.0
        %1769 = vmatprep.subr.mxu0 0.0
        %1770 = vmatpush1.msra.mxu0 0.0
        %1771 = vmatprep.subr.mxu0 0.0
        %1772 = vmatpush1.msra.mxu0 0.0
        %1773 = vmatprep.subr.mxu0 0.0
        %1774 = vmatpush1.msra.mxu0 0.0
        %1775 = vmatprep.subr.mxu0 0.0
        %1776 = vmatpush1.msra.mxu0 0.0
        %1777 = vmatprep.subr.mxu0 0.0
        %1778 = vmatpush1.msra.mxu0 0.0
        %1779 = vmatprep.subr.mxu0 0.0
        %1780 = vmatpush1.msra.mxu0 0.0
        %1781 = vmatprep.subr.mxu0 0.0
        %1782 = vmatpush1.msra.mxu0 0.0
        %1783 = vmatprep.subr.mxu0 0.0
        %1784 = vmatpush1.msra.mxu0 0.0
        %1785 = vmatprep.subr.mxu0 0.0
        %1786 = vmatpush1.msra.mxu0 0.0
        %1787 = vmatprep.subr.mxu0 0.0
        %1788 = vmatpush1.msra.mxu0 0.0
        %1789 = vmatprep.subr.mxu0 0.0
        %1790 = vmatpush1.msra.mxu0 0.0
        %1791 = vmatprep.subr.mxu0 0.0
        %1792 = vmatpush1.msra.mxu0 0.0
        %1793 = vmatprep.subr.mxu0 0.0
        %1794 = vmatpush1.msra.mxu0 0.0
        %1795 = vmatprep.subr.mxu0 0.0
        %1796 = vmatpush1.msra.mxu0 0.0
        %1797 = vmatprep.subr.mxu0 0.0
        %1798 = vmatpush1.msra.mxu0 0.0
        %1799 = vmatprep.subr.mxu0 0.0
        %1800 = vmatpush1.msra.mxu0 0.0
        %1801 = vmatprep.subr.mxu0 0.0
        %1802 = vmatpush1.msra.mxu0 0.0
        %1803 = vmatprep.subr.mxu0 0.0
        %1804 = vmatpush1.msra.mxu0 0.0
        %1805 = vmatprep.mubr.f32.mxu0 0.0
        %v1806 = vand.u32 %v1738, 4294901760
        %v1807 = vsub.f32 %v1738, %v1806
        %v1808 = vand.u32 %v1807, 4294901760
        %v1809 = vsub.f32 %v1807, %v1808
        %v1810 = vand.u32 %v1809, 4294901760
        %1811 = vmatmul.mubr.f32.gmra.mrb[0].mxu0 %v1810
        %v1812 = vpop.f32.mrb[0].mxu0
        %v1813 = vadd.f32 %v1734, %v1812
        %v1814 = vpop.f32.mrb[0].mxu0
        %1815 = vdwg.mxu0
        %1816 = vmatprep.subr.mxu0 0.0
        %v1817 = vand.u32 %v763, 4294901760
        %v1818 = vsub.f32 %v763, %v1817
        %v1819 = vand.u32 %v1818, 4294901760
        %v1820 = vsub.f32 %v1818, %v1819
        %v1821 = vand.u32 %v1820, 4294901760
        %1822 = vmatpush1.msra.mxu0 %v1821
        %1823 = vmatprep.subr.mxu0 0.0
        %1824 = vmatpush1.msra.mxu0 0.0
        %1825 = vmatprep.subr.mxu0 0.0
        %1826 = vmatpush1.msra.mxu0 0.0
        %1827 = vmatprep.subr.mxu0 0.0
        %1828 = vmatpush1.msra.mxu0 0.0
        %1829 = vmatprep.subr.mxu0 0.0
        %1830 = vmatpush1.msra.mxu0 0.0
        %1831 = vmatprep.subr.mxu0 0.0
        %1832 = vmatpush1.msra.mxu0 0.0
        %1833 = vmatprep.subr.mxu0 0.0
        %1834 = vmatpush1.msra.mxu0 0.0
        %1835 = vmatprep.subr.mxu0 0.0
        %1836 = vmatpush1.msra.mxu0 0.0
        %1837 = vmatprep.subr.mxu0 0.0
        %1838 = vmatpush1.msra.mxu0 0.0
        %1839 = vmatprep.subr.mxu0 0.0
        %1840 = vmatpush1.msra.mxu0 0.0
        %1841 = vmatprep.subr.mxu0 0.0
        %1842 = vmatpush1.msra.mxu0 0.0
        %1843 = vmatprep.subr.mxu0 0.0
        %1844 = vmatpush1.msra.mxu0 0.0
        %1845 = vmatprep.subr.mxu0 0.0
        %1846 = vmatpush1.msra.mxu0 0.0
        %1847 = vmatprep.subr.mxu0 0.0
        %1848 = vmatpush1.msra.mxu0 0.0
        %1849 = vmatprep.subr.mxu0 0.0
        %1850 = vmatpush1.msra.mxu0 0.0
        %1851 = vmatprep.subr.mxu0 0.0
        %1852 = vmatpush1.msra.mxu0 0.0
        %1853 = vmatprep.subr.mxu0 0.0
        %1854 = vmatpush1.msra.mxu0 0.0
        %1855 = vmatprep.subr.mxu0 0.0
        %1856 = vmatpush1.msra.mxu0 0.0
        %1857 = vmatprep.subr.mxu0 0.0
        %1858 = vmatpush1.msra.mxu0 0.0
        %1859 = vmatprep.subr.mxu0 0.0
        %1860 = vmatpush1.msra.mxu0 0.0
        %1861 = vmatprep.subr.mxu0 0.0
        %1862 = vmatpush1.msra.mxu0 0.0
        %1863 = vmatprep.subr.mxu0 0.0
        %1864 = vmatpush1.msra.mxu0 0.0
        %1865 = vmatprep.subr.mxu0 0.0
        %1866 = vmatpush1.msra.mxu0 0.0
        %1867 = vmatprep.subr.mxu0 0.0
        %1868 = vmatpush1.msra.mxu0 0.0
        %1869 = vmatprep.subr.mxu0 0.0
        %1870 = vmatpush1.msra.mxu0 0.0
        %1871 = vmatprep.subr.mxu0 0.0
        %1872 = vmatpush1.msra.mxu0 0.0
        %1873 = vmatprep.subr.mxu0 0.0
        %1874 = vmatpush1.msra.mxu0 0.0
        %1875 = vmatprep.subr.mxu0 0.0
        %1876 = vmatpush1.msra.mxu0 0.0
        %1877 = vmatprep.subr.mxu0 0.0
        %1878 = vmatpush1.msra.mxu0 0.0
        %1879 = vmatprep.subr.mxu0 0.0
        %1880 = vmatpush1.msra.mxu0 0.0
        %1881 = vmatprep.subr.mxu0 0.0
        %1882 = vmatpush1.msra.mxu0 0.0
        %1883 = vmatprep.subr.mxu0 0.0
        %1884 = vmatpush1.msra.mxu0 0.0
        %1885 = vmatprep.mubr.f32.mxu0 0.0
        %v1886 = vand.u32 %v1738, 4294901760
        %1887 = vmatmul.mubr.f32.gmra.mrb[0].mxu0 %v1886
        %v1888 = vpop.f32.mrb[0].mxu0
        %v1889 = vadd.f32 %v1813, %v1888
        %v1890 = vpop.f32.mrb[0].mxu0
        %1891 = vdwg.mxu0
        %1892 = vmatprep.subr.mxu0 0.0
        %v1893 = vand.u32 %v763, 4294901760
        %v1894 = vsub.f32 %v763, %v1893
        %1895 = vmatpush1.msra.mxu0 %v1894
        %1896 = vmatprep.subr.mxu0 0.0
        %1897 = vmatpush1.msra.mxu0 0.0
        %1898 = vmatprep.subr.mxu0 0.0
        %1899 = vmatpush1.msra.mxu0 0.0
        %1900 = vmatprep.subr.mxu0 0.0
        %1901 = vmatpush1.msra.mxu0 0.0
        %1902 = vmatprep.subr.mxu0 0.0
        %1903 = vmatpush1.msra.mxu0 0.0
        %1904 = vmatprep.subr.mxu0 0.0
        %1905 = vmatpush1.msra.mxu0 0.0
        %1906 = vmatprep.subr.mxu0 0.0
        %1907 = vmatpush1.msra.mxu0 0.0
        %1908 = vmatprep.subr.mxu0 0.0
        %1909 = vmatpush1.msra.mxu0 0.0
        %1910 = vmatprep.subr.mxu0 0.0
        %1911 = vmatpush1.msra.mxu0 0.0
        %1912 = vmatprep.subr.mxu0 0.0
        %1913 = vmatpush1.msra.mxu0 0.0
        %1914 = vmatprep.subr.mxu0 0.0
        %1915 = vmatpush1.msra.mxu0 0.0
        %1916 = vmatprep.subr.mxu0 0.0
        %1917 = vmatpush1.msra.mxu0 0.0
        %1918 = vmatprep.subr.mxu0 0.0
        %1919 = vmatpush1.msra.mxu0 0.0
        %1920 = vmatprep.subr.mxu0 0.0
        %1921 = vmatpush1.msra.mxu0 0.0
        %1922 = vmatprep.subr.mxu0 0.0
        %1923 = vmatpush1.msra.mxu0 0.0
        %1924 = vmatprep.subr.mxu0 0.0
        %1925 = vmatpush1.msra.mxu0 0.0
        %1926 = vmatprep.subr.mxu0 0.0
        %1927 = vmatpush1.msra.mxu0 0.0
        %1928 = vmatprep.subr.mxu0 0.0
        %1929 = vmatpush1.msra.mxu0 0.0
        %1930 = vmatprep.subr.mxu0 0.0
        %1931 = vmatpush1.msra.mxu0 0.0
        %1932 = vmatprep.subr.mxu0 0.0
        %1933 = vmatpush1.msra.mxu0 0.0
        %1934 = vmatprep.subr.mxu0 0.0
        %1935 = vmatpush1.msra.mxu0 0.0
        %1936 = vmatprep.subr.mxu0 0.0
        %1937 = vmatpush1.msra.mxu0 0.0
        %1938 = vmatprep.subr.mxu0 0.0
        %1939 = vmatpush1.msra.mxu0 0.0
        %1940 = vmatprep.subr.mxu0 0.0
        %1941 = vmatpush1.msra.mxu0 0.0
        %1942 = vmatprep.subr.mxu0 0.0
        %1943 = vmatpush1.msra.mxu0 0.0
        %1944 = vmatprep.subr.mxu0 0.0
        %1945 = vmatpush1.msra.mxu0 0.0
        %1946 = vmatprep.subr.mxu0 0.0
        %1947 = vmatpush1.msra.mxu0 0.0
        %1948 = vmatprep.subr.mxu0 0.0
        %1949 = vmatpush1.msra.mxu0 0.0
        %1950 = vmatprep.subr.mxu0 0.0
        %1951 = vmatpush1.msra.mxu0 0.0
        %1952 = vmatprep.subr.mxu0 0.0
        %1953 = vmatpush1.msra.mxu0 0.0
        %1954 = vmatprep.subr.mxu0 0.0
        %1955 = vmatpush1.msra.mxu0 0.0
        %1956 = vmatprep.subr.mxu0 0.0
        %1957 = vmatpush1.msra.mxu0 0.0
        %1958 = vmatprep.mubr.f32.mxu0 0.0
        %v1959 = vand.u32 %v1738, 4294901760
        %v1960 = vsub.f32 %v1738, %v1959
        %1961 = vmatmul.mubr.f32.gmra.mrb[0].mxu0 %v1960
        %v1962 = vpop.f32.mrb[0].mxu0
        %v1963 = vadd.f32 %v1889, %v1962
        %v1964 = vpop.f32.mrb[0].mxu0
        %1965 = vdwg.mxu0
        %1966 = vmatprep.subr.mxu0 0.0
        %v1967 = vand.u32 %v763, 4294901760
        %1968 = vmatpush1.msra.mxu0 %v1967
        %1969 = vmatprep.subr.mxu0 0.0
        %1970 = vmatpush1.msra.mxu0 0.0
        %1971 = vmatprep.subr.mxu0 0.0
        %1972 = vmatpush1.msra.mxu0 0.0
        %1973 = vmatprep.subr.mxu0 0.0
        %1974 = vmatpush1.msra.mxu0 0.0
        %1975 = vmatprep.subr.mxu0 0.0
        %1976 = vmatpush1.msra.mxu0 0.0
        %1977 = vmatprep.subr.mxu0 0.0
        %1978 = vmatpush1.msra.mxu0 0.0
        %1979 = vmatprep.subr.mxu0 0.0
        %1980 = vmatpush1.msra.mxu0 0.0
        %1981 = vmatprep.subr.mxu0 0.0
        %1982 = vmatpush1.msra.mxu0 0.0
        %1983 = vmatprep.subr.mxu0 0.0
        %1984 = vmatpush1.msra.mxu0 0.0
        %1985 = vmatprep.subr.mxu0 0.0
        %1986 = vmatpush1.msra.mxu0 0.0
        %1987 = vmatprep.subr.mxu0 0.0
        %1988 = vmatpush1.msra.mxu0 0.0
        %1989 = vmatprep.subr.mxu0 0.0
        %1990 = vmatpush1.msra.mxu0 0.0
        %1991 = vmatprep.subr.mxu0 0.0
        %1992 = vmatpush1.msra.mxu0 0.0
        %1993 = vmatprep.subr.mxu0 0.0
        %1994 = vmatpush1.msra.mxu0 0.0
        %1995 = vmatprep.subr.mxu0 0.0
        %1996 = vmatpush1.msra.mxu0 0.0
        %1997 = vmatprep.subr.mxu0 0.0
        %1998 = vmatpush1.msra.mxu0 0.0
        %1999 = vmatprep.subr.mxu0 0.0
        %2000 = vmatpush1.msra.mxu0 0.0
        %2001 = vmatprep.subr.mxu0 0.0
        %2002 = vmatpush1.msra.mxu0 0.0
        %2003 = vmatprep.subr.mxu0 0.0
        %2004 = vmatpush1.msra.mxu0 0.0
        %2005 = vmatprep.subr.mxu0 0.0
        %2006 = vmatpush1.msra.mxu0 0.0
        %2007 = vmatprep.subr.mxu0 0.0
        %2008 = vmatpush1.msra.mxu0 0.0
        %2009 = vmatprep.subr.mxu0 0.0
        %2010 = vmatpush1.msra.mxu0 0.0
        %2011 = vmatprep.subr.mxu0 0.0
        %2012 = vmatpush1.msra.mxu0 0.0
        %2013 = vmatprep.subr.mxu0 0.0
        %2014 = vmatpush1.msra.mxu0 0.0
        %2015 = vmatprep.subr.mxu0 0.0
        %2016 = vmatpush1.msra.mxu0 0.0
        %2017 = vmatprep.subr.mxu0 0.0
        %2018 = vmatpush1.msra.mxu0 0.0
        %2019 = vmatprep.subr.mxu0 0.0
        %2020 = vmatpush1.msra.mxu0 0.0
        %2021 = vmatprep.subr.mxu0 0.0
        %2022 = vmatpush1.msra.mxu0 0.0
        %2023 = vmatprep.subr.mxu0 0.0
        %2024 = vmatpush1.msra.mxu0 0.0
        %2025 = vmatprep.subr.mxu0 0.0
        %2026 = vmatpush1.msra.mxu0 0.0
        %2027 = vmatprep.subr.mxu0 0.0
        %2028 = vmatpush1.msra.mxu0 0.0
        %2029 = vmatprep.subr.mxu0 0.0
        %2030 = vmatpush1.msra.mxu0 0.0
        %2031 = vmatprep.mubr.f32.mxu0 0.0
        %v2032 = vand.u32 %v1738, 4294901760
        %v2033 = vsub.f32 %v1738, %v2032
        %v2034 = vand.u32 %v2033, 4294901760
        %2035 = vmatmul.mubr.f32.gmra.mrb[0].mxu0 %v2034
        %v2036 = vpop.f32.mrb[0].mxu0
        %v2037 = vadd.f32 %v1963, %v2036
        %v2038 = vpop.f32.mrb[0].mxu0
        %2039 = vdwg.mxu0
        %2040 = vmatprep.subr.mxu0 0.0
        %v2041 = vand.u32 %v763, 4294901760
        %v2042 = vsub.f32 %v763, %v2041
        %v2043 = vand.u32 %v2042, 4294901760
        %2044 = vmatpush1.msra.mxu0 %v2043
        %2045 = vmatprep.subr.mxu0 0.0
        %2046 = vmatpush1.msra.mxu0 0.0
        %2047 = vmatprep.subr.mxu0 0.0
        %2048 = vmatpush1.msra.mxu0 0.0
        %2049 = vmatprep.subr.mxu0 0.0
        %2050 = vmatpush1.msra.mxu0 0.0
        %2051 = vmatprep.subr.mxu0 0.0
        %2052 = vmatpush1.msra.mxu0 0.0
        %2053 = vmatprep.subr.mxu0 0.0
        %2054 = vmatpush1.msra.mxu0 0.0
        %2055 = vmatprep.subr.mxu0 0.0
        %2056 = vmatpush1.msra.mxu0 0.0
        %2057 = vmatprep.subr.mxu0 0.0
        %2058 = vmatpush1.msra.mxu0 0.0
        %2059 = vmatprep.subr.mxu0 0.0
        %2060 = vmatpush1.msra.mxu0 0.0
        %2061 = vmatprep.subr.mxu0 0.0
        %2062 = vmatpush1.msra.mxu0 0.0
        %2063 = vmatprep.subr.mxu0 0.0
        %2064 = vmatpush1.msra.mxu0 0.0
        %2065 = vmatprep.subr.mxu0 0.0
        %2066 = vmatpush1.msra.mxu0 0.0
        %2067 = vmatprep.subr.mxu0 0.0
        %2068 = vmatpush1.msra.mxu0 0.0
        %2069 = vmatprep.subr.mxu0 0.0
        %2070 = vmatpush1.msra.mxu0 0.0
        %2071 = vmatprep.subr.mxu0 0.0
        %2072 = vmatpush1.msra.mxu0 0.0
        %2073 = vmatprep.subr.mxu0 0.0
        %2074 = vmatpush1.msra.mxu0 0.0
        %2075 = vmatprep.subr.mxu0 0.0
        %2076 = vmatpush1.msra.mxu0 0.0
        %2077 = vmatprep.subr.mxu0 0.0
        %2078 = vmatpush1.msra.mxu0 0.0
        %2079 = vmatprep.subr.mxu0 0.0
        %2080 = vmatpush1.msra.mxu0 0.0
        %2081 = vmatprep.subr.mxu0 0.0
        %2082 = vmatpush1.msra.mxu0 0.0
        %2083 = vmatprep.subr.mxu0 0.0
        %2084 = vmatpush1.msra.mxu0 0.0
        %2085 = vmatprep.subr.mxu0 0.0
        %2086 = vmatpush1.msra.mxu0 0.0
        %2087 = vmatprep.subr.mxu0 0.0
        %2088 = vmatpush1.msra.mxu0 0.0
        %2089 = vmatprep.subr.mxu0 0.0
        %2090 = vmatpush1.msra.mxu0 0.0
        %2091 = vmatprep.subr.mxu0 0.0
        %2092 = vmatpush1.msra.mxu0 0.0
        %2093 = vmatprep.subr.mxu0 0.0
        %2094 = vmatpush1.msra.mxu0 0.0
        %2095 = vmatprep.subr.mxu0 0.0
        %2096 = vmatpush1.msra.mxu0 0.0
        %2097 = vmatprep.subr.mxu0 0.0
        %2098 = vmatpush1.msra.mxu0 0.0
        %2099 = vmatprep.subr.mxu0 0.0
        %2100 = vmatpush1.msra.mxu0 0.0
        %2101 = vmatprep.subr.mxu0 0.0
        %2102 = vmatpush1.msra.mxu0 0.0
        %2103 = vmatprep.subr.mxu0 0.0
        %2104 = vmatpush1.msra.mxu0 0.0
        %2105 = vmatprep.subr.mxu0 0.0
        %2106 = vmatpush1.msra.mxu0 0.0
        %2107 = vmatprep.mubr.f32.mxu0 0.0
        %v2108 = vand.u32 %v1738, 4294901760
        %2109 = vmatmul.mubr.f32.gmra.mrb[0].mxu0 %v2108
        %v2110 = vpop.f32.mrb[0].mxu0
        %v2111 = vadd.f32 %v2037, %v2110
        %v2112 = vpop.f32.mrb[0].mxu0
        %2113 = vdwg.mxu0
        %2114 = vmatprep.subr.mxu0 0.0
        %v2115 = vand.u32 %v763, 4294901760
        %2116 = vmatpush1.msra.mxu0 %v2115
        %2117 = vmatprep.subr.mxu0 0.0
        %2118 = vmatpush1.msra.mxu0 0.0
        %2119 = vmatprep.subr.mxu0 0.0
        %2120 = vmatpush1.msra.mxu0 0.0
        %2121 = vmatprep.subr.mxu0 0.0
        %2122 = vmatpush1.msra.mxu0 0.0
        %2123 = vmatprep.subr.mxu0 0.0
        %2124 = vmatpush1.msra.mxu0 0.0
        %2125 = vmatprep.subr.mxu0 0.0
        %2126 = vmatpush1.msra.mxu0 0.0
        %2127 = vmatprep.subr.mxu0 0.0
        %2128 = vmatpush1.msra.mxu0 0.0
        %2129 = vmatprep.subr.mxu0 0.0
        %2130 = vmatpush1.msra.mxu0 0.0
        %2131 = vmatprep.subr.mxu0 0.0
        %2132 = vmatpush1.msra.mxu0 0.0
        %2133 = vmatprep.subr.mxu0 0.0
        %2134 = vmatpush1.msra.mxu0 0.0
        %2135 = vmatprep.subr.mxu0 0.0
        %2136 = vmatpush1.msra.mxu0 0.0
        %2137 = vmatprep.subr.mxu0 0.0
        %2138 = vmatpush1.msra.mxu0 0.0
        %2139 = vmatprep.subr.mxu0 0.0
        %2140 = vmatpush1.msra.mxu0 0.0
        %2141 = vmatprep.subr.mxu0 0.0
        %2142 = vmatpush1.msra.mxu0 0.0
        %2143 = vmatprep.subr.mxu0 0.0
        %2144 = vmatpush1.msra.mxu0 0.0
        %2145 = vmatprep.subr.mxu0 0.0
        %2146 = vmatpush1.msra.mxu0 0.0
        %2147 = vmatprep.subr.mxu0 0.0
        %2148 = vmatpush1.msra.mxu0 0.0
        %2149 = vmatprep.subr.mxu0 0.0
        %2150 = vmatpush1.msra.mxu0 0.0
        %2151 = vmatprep.subr.mxu0 0.0
        %2152 = vmatpush1.msra.mxu0 0.0
        %2153 = vmatprep.subr.mxu0 0.0
        %2154 = vmatpush1.msra.mxu0 0.0
        %2155 = vmatprep.subr.mxu0 0.0
        %2156 = vmatpush1.msra.mxu0 0.0
        %2157 = vmatprep.subr.mxu0 0.0
        %2158 = vmatpush1.msra.mxu0 0.0
        %2159 = vmatprep.subr.mxu0 0.0
        %2160 = vmatpush1.msra.mxu0 0.0
        %2161 = vmatprep.subr.mxu0 0.0
        %2162 = vmatpush1.msra.mxu0 0.0
        %2163 = vmatprep.subr.mxu0 0.0
        %2164 = vmatpush1.msra.mxu0 0.0
        %2165 = vmatprep.subr.mxu0 0.0
        %2166 = vmatpush1.msra.mxu0 0.0
        %2167 = vmatprep.subr.mxu0 0.0
        %2168 = vmatpush1.msra.mxu0 0.0
        %2169 = vmatprep.subr.mxu0 0.0
        %2170 = vmatpush1.msra.mxu0 0.0
        %2171 = vmatprep.subr.mxu0 0.0
        %2172 = vmatpush1.msra.mxu0 0.0
        %2173 = vmatprep.subr.mxu0 0.0
        %2174 = vmatpush1.msra.mxu0 0.0
        %2175 = vmatprep.subr.mxu0 0.0
        %2176 = vmatpush1.msra.mxu0 0.0
        %2177 = vmatprep.subr.mxu0 0.0
        %2178 = vmatpush1.msra.mxu0 0.0
        %2179 = vmatprep.mubr.f32.mxu0 0.0
        %v2180 = vand.u32 %v1738, 4294901760
        %2181 = vmatmul.mubr.f32.gmra.mrb[0].mxu0 %v2180
        %v2182 = vpop.f32.mrb[0].mxu0
        %v2183 = vadd.f32 %v2111, %v2182
        %v2184 = vpop.f32.mrb[0].mxu0
        %2185 = vdwg.mxu0
        %v2186 = vld [vmem:[%s3] sm:$0x1]
        %v2188 = vlaneseq
        %v2189 = vshrl.u32 %v2188, 7
        %v2190 = vsub.s32 0, %v2189
        %v2191 = vrot.slane %v2186, %v2190
        %v2193 = vadd.f32 %v2183, %v2191
        %2194 = vst [vmem:[%s263] sm:$0xff] %v2193
        %s2195 = sand.u32 %s126, 1
        %s2196 = scalar_lea.sflag [#allocation4], %s2195
        %s2197 = sand.u32 %s126, 1
        %s2198 = smul.addr %s2197, 8
        %s2199 = scalar_lea.vmem [#allocation8], %s2198
        // Predicated region
        $region49: #{tpu_custom_call.1} parent=35 // pred_check
          %p2200 = pneg %p136
        $region50: #{tpu_custom_call.1} parent=35 // pred_check_branch
          %2202 = sbr.rel (%p2200) target = $region52
        $region51: #{tpu_custom_call.1} parent=35 // pred_region
          %s2204 = ssub.s32 128, 128
          %2205 = vsyncadd %s2196, %s2204
          %s2206 = smul.addr %s24, 128
          %s2207 = scalar_lea.hbm %s4, %s2206
          %s2209 = sshll.u32 %s2199, 4
          %s2210 = int_to_ptr.vmem [resolvable:$true] %s2209
          %2212 = dma.vmem_to_hbm [thread:$0]  %s2210, 128, %s2207, %s2196
        $region52: #{tpu_custom_call.1} parent=35 // pred_fallthru
          _
      $region36: #{tpu_custom_call.1} parent=5 // pred_fallthru
        _
      %p2213 = scmp.le.s32.totalorder 2, %s19
      // Predicated region
      $region53: #{tpu_custom_call.1} parent=5 // pred_check
        %p2214 = pneg %p2213
      $region54: #{tpu_custom_call.1} parent=5 // pred_check_branch
        %2216 = sbr.rel (%p2214) target = $region56
      $region55: #{tpu_custom_call.1} parent=5 // pred_region
        %s2217 = ssub.s32 %s19, 2
        // Predicated region
        $region57: #{tpu_custom_call.1} parent=55 // pred_check
          %p2218 = pneg %p142
        $region58: #{tpu_custom_call.1} parent=55 // pred_check_branch
          %2220 = sbr.rel (%p2218) target = $region60
        $region59: #{tpu_custom_call.1} parent=55 // pred_region
          %s2221 = sand.u32 %s127, 1
          %s2222 = scalar_lea.sflag [#allocation4], %s2221
          %s2223 = sand.u32 %s127, 1
          %s2224 = smul.addr %s2223, 8
          %s2225 = scalar_lea.vmem [#allocation8], %s2224
          %2226 = dma.done %s2222, 128
        $region60: #{tpu_custom_call.1} parent=55 // pred_fallthru
          _
      $region56: #{tpu_custom_call.1} parent=5 // pred_fallthru
        _
    $region6: #{tpu_custom_call.1} parent=1 // loop_footer
      %s23 = sadd.s32 1, %s19
    $region7: #{tpu_custom_call.1} parent=1 // loop_footer_branch
      %18 = sbr.rel target = $region3
    $region8: #{tpu_custom_call.1} parent=1 // loop_exit
      _
    %2227 = vsyncpa [#allocation3], 1
    %s2228 = scalar_lea.sflag [#allocation3], 1
    %2229 = vsyncpa %s2228, 1
    %2230 = vsyncpa [#allocation6], 1
    %s2231 = scalar_lea.sflag [#allocation6], 1
    %2232 = vsyncpa %s2231, 1
    %2233 = vsyncpa [#allocation4], 1
    %s2234 = scalar_lea.sflag [#allocation4], 1
    %2235 = vsyncpa %s2234, 1

</llo_original>
